<compile_context>
chip_gen: v6e
topology: v6e:2x2x1
jax: 0.10.0
libtpu: 0.0.40
codegen_flags: <defaults>
</compile_context>

<pallas_src>
import functools
import math

import jax
import jax.numpy as jnp
from jax.experimental import pallas as pl
from jax.experimental.pallas import tpu as pltpu


def _round_up(x, m):
    return ((x + m - 1) // m) * m


# ---------------------------------------------------------------------------
# Deterministic parameter init (shapes follow the PyTorch __init__).
# nn.Linear weights are kept transposed as (in_dim, out_dim) so every matmul
# in the kernel is y = x @ W^T + b on the MXU.
# ---------------------------------------------------------------------------
def _linear_params(key, fan_in, fan_out):
    kw, kb = jax.random.split(key)
    bound = 1.0 / math.sqrt(fan_in)
    wt = jax.random.uniform(kw, (fan_in, fan_out), jnp.float32, -bound, bound)
    b = jax.random.uniform(kb, (1, fan_out), jnp.float32, -bound, bound)
    return wt, b


def _mlp_block_params(key, dim):
    hidden = int(2 * dim / 3)  # FeedForward: hidden_dim = int(2 * hidden_dim / 3)
    k1, k2, k3 = jax.random.split(key, 3)
    b_in = 1.0 / math.sqrt(dim)
    b_h = 1.0 / math.sqrt(hidden)
    return dict(
        g=jnp.ones((1, dim), jnp.float32),  # RMSNorm weight
        w1t=jax.random.uniform(k1, (dim, hidden), jnp.float32, -b_in, b_in),
        w3t=jax.random.uniform(k3, (dim, hidden), jnp.float32, -b_in, b_in),
        w2t=jax.random.uniform(k2, (hidden, dim), jnp.float32, -b_h, b_h),
    )


def init_tab_auto_encoder(key, input_dim, dim, n_tab_layers):
    keys = jax.random.split(key, 2 + 2 * n_tab_layers)
    return dict(
        in_layer=_linear_params(keys[0], input_dim, dim),
        enc_blocks=[_mlp_block_params(keys[1 + i], dim) for i in range(n_tab_layers)],
        dec_blocks=[
            _mlp_block_params(keys[1 + n_tab_layers + i], dim)
            for i in range(n_tab_layers)
        ],
        out_layer=_linear_params(keys[1 + 2 * n_tab_layers], dim, input_dim),
    )


# ---------------------------------------------------------------------------
# Fused forward:  F.dropout(tab) -> TabAutoEncoder -> AutoEncoderLoss_v2
# One pallas_call, batch-tiled, weights VMEM-resident.
# ---------------------------------------------------------------------------
def fused_tab_autoencoder_forward(
    params, tab, seed, *,
    tab_drop_p=0.3, n_cat_features=1, cat_dim=1, c=1.0,
    eps=1e-5, max_tile_b=512, use_bf16_mxu=True,
):
    B, in_dim = tab.shape
    in_wt_f32, in_b = params["in_layer"]
    out_wt_f32, out_b = params["out_layer"]
    dim = in_wt_f32.shape[1]
    blocks = list(params["enc_blocks"]) + list(params["dec_blocks"])  # enc then dec
    n_layers = len(blocks)
    hidden = blocks[0]["w2t"].shape[0]
    n_cat = int(n_cat_features)
    d_real = in_dim

    mxu_dtype = jnp.bfloat16 if use_bf16_mxu else jnp.float32

    drop_p = float(tab_drop_p)
    inv_keep = 1.0 / (1.0 - drop_p) if drop_p > 0.0 else 1.0

    # ---- lane-dense layout: pad the feature axis to 128 --------------------
    in_pad = _round_up(in_dim, 128)

    # Dropout 1/(1-p) rescale folded into in_wt rows (x stays unscaled for loss).
    in_wt = (jnp.zeros((in_pad, dim), jnp.float32)
             .at[:in_dim].set(in_wt_f32 * inv_keep)).astype(mxu_dtype)
    # RMSNorm gain folded into W1|W3 (in f32, before the bf16 cast).
    w13_all = jnp.stack(
        [blk["g"][0][:, None] * jnp.concatenate([blk["w1t"], blk["w3t"]], axis=1)
         for blk in blocks], axis=0).astype(mxu_dtype)                # (2L, D, 2H)
    w2_all = jnp.stack([blk["w2t"] for blk in blocks], axis=0).astype(mxu_dtype)
    out_wt = (jnp.zeros((dim, in_pad), jnp.float32)
              .at[:, :in_dim].set(out_wt_f32)).astype(mxu_dtype)
    out_b_p = jnp.zeros((1, in_pad), jnp.float32).at[:, :in_dim].set(out_b)

    # ---- batch tiling: minimise padding, multiple of 16 (bf16 sublanes),
    # and >=2 tiles when possible so both v7x TensorCores get work ----------
    sub = 16 if use_bf16_mxu else 8
    n_tiles = max(1, pl.cdiv(B, max_tile_b))
    if n_tiles == 1 and B >= 2 * sub:
        n_tiles = 2
    tile_b = _round_up(pl.cdiv(B, n_tiles), sub)
    n_tiles = pl.cdiv(B, tile_b)
    b_pad = n_tiles * tile_b

    tab_p = jnp.zeros((b_pad, in_pad), jnp.float32).at[:B, :in_dim].set(tab)

    # Dropout keep-mask generated host-side (portable; avoids pltpu.prng_* which
    # has no lowering on the interpret/CPU fallback path). Callers vary `seed`
    # per training step for fresh masks.
    if drop_p > 0.0:
        keep = jax.random.bernoulli(jax.random.PRNGKey(seed), 1.0 - drop_p,
                                    (B, in_dim)).astype(jnp.float32)
    else:
        keep = jnp.ones((B, in_dim), jnp.float32)
    mask_p = jnp.zeros((b_pad, in_pad), jnp.float32).at[:B, :in_dim].set(keep)

    def kernel(tab_ref, mask_ref, in_wt_ref, in_b_ref, w13_ref, w2_ref,
               out_wt_ref, out_b_ref, recon_ref, loss_ref):
        i = pl.program_id(0)
        x_tab = tab_ref[...]                      # (tile_b, in_pad) f32, loss target
        x_in = x_tab * mask_ref[...]              # dropout; 1/(1-p) folded into in_wt

        def mxu(a):
            return a.astype(mxu_dtype)

        # ---- TabularEncoder.in_layer ---------------------------------------
        h = jnp.dot(mxu(x_in), in_wt_ref[...],
                    preferred_element_type=jnp.float32) + in_b_ref[...]

        # ---- 2*n_tab_layers MLPBlocks (enc then dec); weights VMEM-resident.
        # Static unroll (fine for small depth).
        # TODO(synk): for deep stacks (2*n_tab_layers > ~6) switch to
        # lax.fori_loop with dynamic first-axis indexing into w13_ref/w2_ref.
        for l in range(n_layers):
            w13 = w13_ref[l]                      # (D, 2H) mxu dtype (gain folded)
            w2 = w2_ref[l]                        # (H, D)  mxu dtype
            ms = jnp.mean(h * h, axis=-1, keepdims=True)      # RMSNorm (f32)
            xn = h * jax.lax.rsqrt(ms + eps)
            h13 = jnp.dot(mxu(xn), w13, preferred_element_type=jnp.float32)
            h1 = h13[:, :hidden]
            h3 = h13[:, hidden:]
            gate = (h1 * jax.nn.sigmoid(h1)) * h3             # SiLU(w1 x) * w3 x
            h = h + jnp.dot(mxu(gate), w2, preferred_element_type=jnp.float32)

        # ---- out_layer + TabAutoEncoder: out[:, -1] = sigmoid(out[:, -cat_dim])
        y = jnp.dot(mxu(h), out_wt_ref[...],
                    preferred_element_type=jnp.float32) + out_b_ref[...]
        col = jax.lax.broadcasted_iota(jnp.int32, y.shape, 1)
        sig_src = jax.nn.sigmoid(y[:, d_real - cat_dim: d_real - cat_dim + 1])
        y = jnp.where(col == d_real - 1, sig_src, y)
        recon_ref[...] = y                        # lane-dense full-slab store

        # ---- AutoEncoderLoss_v2 partial sums (padded rows/cols masked) ------
        row_ok = (jax.lax.broadcasted_iota(jnp.int32, y.shape, 0) + i * tile_b) < B
        if d_real - n_cat > 0:
            is_num = col < (d_real - n_cat)
            sq = (y - x_tab) * (y - x_tab)
            num_sum = jnp.sum(jnp.where(row_ok & is_num, sq, 0.0))
        else:
            num_sum = jnp.float32(0.0)

        if n_cat > 0:
            # BCE only on the categorical slice (2*n_cat log calls per row).
            # TODO(synk): for n_cat_features > 1 only the last column is
            # sigmoid'd (exactly what TabAutoEncoder does); other categorical
            # columns are raw logits, matching the PyTorch module's semantics.
            yc = y[:, d_real - n_cat: d_real]
            xc = x_tab[:, d_real - n_cat: d_real]
            log_y = jnp.maximum(jnp.log(yc), -100.0)        # torch BCELoss clamp
            log_1my = jnp.maximum(jnp.log(1.0 - yc), -100.0)
            bce = -(xc * log_y + (1.0 - xc) * log_1my)
            cat_sum = jnp.sum(jnp.where(row_ok[:, :n_cat], bce, 0.0))
        else:
            cat_sum = jnp.float32(0.0)

        lane = jax.lax.broadcasted_iota(jnp.int32, (8, 128), 1)
        loss_ref[0] = jnp.where(lane == 0, num_sum,
                                jnp.where(lane == 1, cat_sum, 0.0))

    grid_spec = pltpu.PrefetchScalarGridSpec(
        num_scalar_prefetch=0,
        grid=(n_tiles,),
        in_specs=[
            pl.BlockSpec((tile_b, in_pad), lambda i: (i, 0)),             # tab tile
            pl.BlockSpec((tile_b, in_pad), lambda i: (i, 0)),             # keep mask
            pl.BlockSpec((in_pad, dim), lambda i: (0, 0)),                # in W^T
            pl.BlockSpec((1, dim), lambda i: (0, 0)),                     # in b
            pl.BlockSpec((n_layers, dim, 2 * hidden), lambda i: (0, 0, 0)),  # W1|W3
            pl.BlockSpec((n_layers, hidden, dim), lambda i: (0, 0, 0)),   # W2
            pl.BlockSpec((dim, in_pad), lambda i: (0, 0)),                # out W^T
            pl.BlockSpec((1, in_pad), lambda i: (0, 0)),                  # out b
        ],
        out_specs=[
            pl.BlockSpec((tile_b, in_pad), lambda i: (i, 0)),             # recon
            pl.BlockSpec((1, 8, 128), lambda i: (i, 0, 0)),               # loss sums
        ],
    )

    # Per-generation VMEM limit: ~3/4 of physical (48 MiB on v7x's 64 MiB,
    # 96 MiB on v5e/v6e's 128 MiB); fall back to a safe 48 MiB everywhere else.
    try:
        vmem_cap = pltpu.get_tpu_info().vmem_capacity_bytes
        vmem_limit = min((int(vmem_cap) * 3) // 4, 96 * 1024 * 1024)
    except Exception:
        vmem_limit = 48 * 1024 * 1024

    recon_p, partials = pl.pallas_call(
        kernel,
        out_shape=(
            jax.ShapeDtypeStruct((b_pad, in_pad), jnp.float32),
            jax.ShapeDtypeStruct((n_tiles, 8, 128), jnp.float32),
        ),
        grid_spec=grid_spec,
        compiler_params=pltpu.CompilerParams(
            dimension_semantics=("parallel",),     # v7x: shard batch tiles over 2 TCs
            vmem_limit_bytes=vmem_limit,
        ),
    )(tab_p, mask_p, in_wt, in_b, w13_all, w2_all, out_wt, out_b_p)

    recon = recon_p[:B, :in_dim]
    num_sum = jnp.sum(partials[:, 0, 0])
    cat_sum = jnp.sum(partials[:, 0, 1])
    num_cols = in_dim - n_cat
    num_loss = num_sum / float(B * num_cols) if num_cols > 0 else 0.0
    cat_loss = cat_sum / float(B * n_cat) if n_cat > 0 else 0.0
    loss = c * cat_loss + num_loss
    # TODO(synk): image branch (base_encoder ResNet, SimCLRProjectionHead,
    # SimCLRLoss, CLIPLoss, torchvision augmentations, momentum-encoder updates)
    # is not defined in the provided source (and `i3` is used before assignment),
    # so it is not translated.
    return loss, recon


# ---------------------------------------------------------------------------
# Pure-JAX reference (no dropout) for correctness spot-checks.
# ---------------------------------------------------------------------------
def _tab_forward_ref(params, tab, n_cat_features=1, cat_dim=1, c=1.0, eps=1e-5):
    wt, b = params["in_layer"]
    h = tab @ wt + b
    for blk in list(params["enc_blocks"]) + list(params["dec_blocks"]):
        ms = jnp.mean(h * h, axis=-1, keepdims=True)
        xn = h * jax.lax.rsqrt(ms + eps) * blk["g"]
        h1 = xn @ blk["w1t"]
        h3 = xn @ blk["w3t"]
        h = h + ((h1 * jax.nn.sigmoid(h1)) * h3) @ blk["w2t"]
    wt, b = params["out_layer"]
    y = h @ wt + b
    y = y.at[:, -1].set(jax.nn.sigmoid(y[:, -cat_dim]))
    d = y.shape[-1]
    num_loss = jnp.mean((y[:, : d - n_cat_features] - tab[:, : d - n_cat_features]) ** 2)
    yc, xc = y[:, d - n_cat_features:], tab[:, d - n_cat_features:]
    bce = -(xc * jnp.maximum(jnp.log(yc), -100.0)
            + (1.0 - xc) * jnp.maximum(jnp.log(1.0 - yc), -100.0))
    return c * jnp.mean(bce) + num_loss, y


# ---------------------------------------------------------------------------
if __name__ == "__main__":
    B, IN_DIM, DIM, N_TAB_LAYERS = 8, 10, 192, 2   # small shapes; ffn hidden = 128

    key = jax.random.PRNGKey(0)
    kp, knum, kcat, _ = jax.random.split(key, 4)
    params = init_tab_auto_encoder(kp, IN_DIM, DIM, N_TAB_LAYERS)

    # tab: (B, IN_DIM); last column is the categorical feature in [0, 1] (BCE target)
    num = jax.random.normal(knum, (B, IN_DIM - 1), jnp.float32)
    cat = jax.random.bernoulli(kcat, 0.5, (B, 1)).astype(jnp.float32)
    tab = jnp.concatenate([num, cat], axis=1)

    # (1) correctness: dropout off, f32 MXU path vs pure-JAX reference
    loss0, recon0 = fused_tab_autoencoder_forward(
        params, tab, seed=0, tab_drop_p=0.0, use_bf16_mxu=False)
    loss_r, recon_r = _tab_forward_ref(params, tab)
    assert recon0.shape == (B, IN_DIM)
    assert jnp.allclose(recon0, recon_r, atol=5e-2, rtol=5e-2), "f32 recon mismatch"
    assert jnp.allclose(loss0, loss_r, atol=5e-2, rtol=5e-2), "f32 loss mismatch"

    # (2) bf16-MXU path validation (loose tolerance: bf16 inputs, f32 accumulation)
    loss_b, recon_b = fused_tab_autoencoder_forward(
        params, tab, seed=0, tab_drop_p=0.0, use_bf16_mxu=True)
    assert jnp.allclose(recon_b, recon_r, atol=1e-1, rtol=1e-1), "bf16 recon drift"
    assert jnp.allclose(loss_b, loss_r, atol=1e-1, rtol=1e-1), "bf16 loss drift"

    # (3) actual training forward path: dropout on + bf16 MXU inputs, jitted
    fwd = jax.jit(functools.partial(
        fused_tab_autoencoder_forward,
        tab_drop_p=0.3, n_cat_features=1, use_bf16_mxu=True))
    loss, recon = fwd(params, tab, jnp.int32(1234))
    jax.block_until_ready((loss, recon))
    assert recon.shape == (B, IN_DIM)
    assert bool(jnp.isfinite(loss))
    print("KERNEL_OK")
</pallas_src>

<mosaic_0001>
module attributes {stable_mosaic.version = 11 : i64} {
  func.func @kernel(%arg0: i32, %arg1: memref<8x128xf32, #tpu.memory_space<vmem>>, %arg2: memref<8x128xf32, #tpu.memory_space<vmem>>, %arg3: memref<128x192xf32, #tpu.memory_space<vmem>>, %arg4: memref<1x192xf32, #tpu.memory_space<vmem>>, %arg5: memref<4x192x256xf32, #tpu.memory_space<vmem>>, %arg6: memref<4x128x192xf32, #tpu.memory_space<vmem>>, %arg7: memref<192x128xf32, #tpu.memory_space<vmem>>, %arg8: memref<1x128xf32, #tpu.memory_space<vmem>>, %arg9: memref<8x128xf32, #tpu.memory_space<vmem>>, %arg10: memref<1x8x128xf32, #tpu.memory_space<vmem>>) attributes {dimension_semantics = [#tpu.dimension_semantics<parallel>], iteration_bounds = array<i64: 1>, scalar_prefetch = 0 : i64, scratch_operands = 0 : i64, tpu.core_type = #tpu.core_type<tc>, window_params = [{transform_indices = @transform_0, window_bounds = array<i64: 8, 128>}, {transform_indices = @transform_1, window_bounds = array<i64: 8, 128>}, {pipeline_mode = #tpu.pipeline_mode<synchronous>, transform_indices = @transform_2, window_bounds = array<i64: 128, 192>}, {pipeline_mode = #tpu.pipeline_mode<synchronous>, transform_indices = @transform_3, window_bounds = array<i64: 1, 192>}, {pipeline_mode = #tpu.pipeline_mode<synchronous>, transform_indices = @transform_4, window_bounds = array<i64: 4, 192, 256>}, {pipeline_mode = #tpu.pipeline_mode<synchronous>, transform_indices = @transform_5, window_bounds = array<i64: 4, 128, 192>}, {pipeline_mode = #tpu.pipeline_mode<synchronous>, transform_indices = @transform_6, window_bounds = array<i64: 192, 128>}, {pipeline_mode = #tpu.pipeline_mode<synchronous>, transform_indices = @transform_7, window_bounds = array<i64: 1, 128>}, {transform_indices = @transform_8, window_bounds = array<i64: 8, 128>}, {transform_indices = @transform_9, window_bounds = array<i64: 1, 8, 128>}]} {
    %c0 = arith.constant 0 : index
    %c0_0 = arith.constant 0 : index
    %0 = vector.load %arg1[%c0, %c0_0] : memref<8x128xf32, #tpu.memory_space<vmem>>, vector<8x128xf32>
    %c0_1 = arith.constant 0 : index
    %c0_2 = arith.constant 0 : index
    %1 = vector.load %arg2[%c0_1, %c0_2] : memref<8x128xf32, #tpu.memory_space<vmem>>, vector<8x128xf32>
    %2 = arith.mulf %0, %1 : vector<8x128xf32>
    %c0_3 = arith.constant 0 : index
    %c0_4 = arith.constant 0 : index
    %3 = vector.load %arg3[%c0_3, %c0_4] : memref<128x192xf32, #tpu.memory_space<vmem>>, vector<128x192xf32>
    %cst = arith.constant dense<0.000000e+00> : vector<8x192xf32>
    %4 = tpu.matmul %2, %3, %cst {dimension_numbers = #tpu.dot_dimension_numbers<[1], [0], [0], [1], [0, 0, 1, 1], [], []>} : vector<8x128xf32>, vector<128x192xf32>, vector<8x192xf32> -> vector<8x192xf32>
    %c0_5 = arith.constant 0 : index
    %c0_6 = arith.constant 0 : index
    %5 = vector.load %arg4[%c0_5, %c0_6] : memref<1x192xf32, #tpu.memory_space<vmem>>, vector<1x192xf32>
    %6 = vector.broadcast %5 : vector<1x192xf32> to vector<8x192xf32>
    %7 = arith.addf %4, %6 : vector<8x192xf32>
    %c0_7 = arith.constant 0 : index
    %c0_8 = arith.constant 0 : index
    %c0_9 = arith.constant 0 : index
    %8 = vector.load %arg5[%c0_7, %c0_8, %c0_9] : memref<4x192x256xf32, #tpu.memory_space<vmem>>, vector<1x192x256xf32>
    %9 = vector.shape_cast %8 : vector<1x192x256xf32> to vector<192x256xf32>
    %c0_10 = arith.constant 0 : index
    %c0_11 = arith.constant 0 : index
    %c0_12 = arith.constant 0 : index
    %10 = vector.load %arg6[%c0_10, %c0_11, %c0_12] : memref<4x128x192xf32, #tpu.memory_space<vmem>>, vector<1x128x192xf32>
    %11 = vector.shape_cast %10 : vector<1x128x192xf32> to vector<128x192xf32>
    %12 = arith.mulf %7, %7 : vector<8x192xf32>
    %cst_13 = arith.constant dense<0.000000e+00> : vector<8xf32>
    %13 = vector.multi_reduction <add>, %12, %cst_13 [1] : vector<8x192xf32> to vector<8xf32>
    %14 = vector.shape_cast %13 : vector<8xf32> to vector<8x1xf32>
    %cst_14 = arith.constant 1.920000e+02 : f32
    %15 = vector.broadcast %cst_14 : f32 to vector<8x1xf32>
    %16 = arith.divf %14, %15 : vector<8x1xf32>
    %cst_15 = arith.constant 9.99999974E-6 : f32
    %17 = vector.broadcast %cst_15 : f32 to vector<8x1xf32>
    %18 = arith.addf %16, %17 : vector<8x1xf32>
    %19 = math.rsqrt %18 : vector<8x1xf32>
    %20 = vector.broadcast %19 : vector<8x1xf32> to vector<8x192xf32>
    %21 = arith.mulf %7, %20 : vector<8x192xf32>
    %cst_16 = arith.constant dense<0.000000e+00> : vector<8x256xf32>
    %22 = tpu.matmul %21, %9, %cst_16 {dimension_numbers = #tpu.dot_dimension_numbers<[1], [0], [0], [1], [0, 0, 1, 1], [], []>} : vector<8x192xf32>, vector<192x256xf32>, vector<8x256xf32> -> vector<8x256xf32>
    %23 = vector.extract_strided_slice %22 {offsets = [0, 0], sizes = [8, 128], strides = [1, 1]} : vector<8x256xf32> to vector<8x128xf32>
    %24 = vector.extract_strided_slice %22 {offsets = [0, 128], sizes = [8, 128], strides = [1, 1]} : vector<8x256xf32> to vector<8x128xf32>
    %25 = arith.negf %23 : vector<8x128xf32>
    %26 = math.exp %25 : vector<8x128xf32>
    %cst_17 = arith.constant 1.000000e+00 : f32
    %27 = vector.broadcast %cst_17 : f32 to vector<8x128xf32>
    %28 = arith.addf %27, %26 : vector<8x128xf32>
    %29 = arith.divf %27, %28 : vector<8x128xf32>
    %30 = arith.mulf %23, %29 : vector<8x128xf32>
    %31 = arith.mulf %30, %24 : vector<8x128xf32>
    %cst_18 = arith.constant dense<0.000000e+00> : vector<8x192xf32>
    %32 = tpu.matmul %31, %11, %cst_18 {dimension_numbers = #tpu.dot_dimension_numbers<[1], [0], [0], [1], [0, 0, 1, 1], [], []>} : vector<8x128xf32>, vector<128x192xf32>, vector<8x192xf32> -> vector<8x192xf32>
    %33 = arith.addf %7, %32 : vector<8x192xf32>
    %c1 = arith.constant 1 : index
    %c0_19 = arith.constant 0 : index
    %c0_20 = arith.constant 0 : index
    %34 = vector.load %arg5[%c1, %c0_19, %c0_20] : memref<4x192x256xf32, #tpu.memory_space<vmem>>, vector<1x192x256xf32>
    %35 = vector.shape_cast %34 : vector<1x192x256xf32> to vector<192x256xf32>
    %c1_21 = arith.constant 1 : index
    %c0_22 = arith.constant 0 : index
    %c0_23 = arith.constant 0 : index
    %36 = vector.load %arg6[%c1_21, %c0_22, %c0_23] : memref<4x128x192xf32, #tpu.memory_space<vmem>>, vector<1x128x192xf32>
    %37 = vector.shape_cast %36 : vector<1x128x192xf32> to vector<128x192xf32>
    %38 = arith.mulf %33, %33 : vector<8x192xf32>
    %cst_24 = arith.constant dense<0.000000e+00> : vector<8xf32>
    %39 = vector.multi_reduction <add>, %38, %cst_24 [1] : vector<8x192xf32> to vector<8xf32>
    %40 = vector.shape_cast %39 : vector<8xf32> to vector<8x1xf32>
    %cst_25 = arith.constant 1.920000e+02 : f32
    %41 = vector.broadcast %cst_25 : f32 to vector<8x1xf32>
    %42 = arith.divf %40, %41 : vector<8x1xf32>
    %cst_26 = arith.constant 9.99999974E-6 : f32
    %43 = vector.broadcast %cst_26 : f32 to vector<8x1xf32>
    %44 = arith.addf %42, %43 : vector<8x1xf32>
    %45 = math.rsqrt %44 : vector<8x1xf32>
    %46 = vector.broadcast %45 : vector<8x1xf32> to vector<8x192xf32>
    %47 = arith.mulf %33, %46 : vector<8x192xf32>
    %cst_27 = arith.constant dense<0.000000e+00> : vector<8x256xf32>
    %48 = tpu.matmul %47, %35, %cst_27 {dimension_numbers = #tpu.dot_dimension_numbers<[1], [0], [0], [1], [0, 0, 1, 1], [], []>} : vector<8x192xf32>, vector<192x256xf32>, vector<8x256xf32> -> vector<8x256xf32>
    %49 = vector.extract_strided_slice %48 {offsets = [0, 0], sizes = [8, 128], strides = [1, 1]} : vector<8x256xf32> to vector<8x128xf32>
    %50 = vector.extract_strided_slice %48 {offsets = [0, 128], sizes = [8, 128], strides = [1, 1]} : vector<8x256xf32> to vector<8x128xf32>
    %51 = arith.negf %49 : vector<8x128xf32>
    %52 = math.exp %51 : vector<8x128xf32>
    %cst_28 = arith.constant 1.000000e+00 : f32
    %53 = vector.broadcast %cst_28 : f32 to vector<8x128xf32>
    %54 = arith.addf %53, %52 : vector<8x128xf32>
    %55 = arith.divf %53, %54 : vector<8x128xf32>
    %56 = arith.mulf %49, %55 : vector<8x128xf32>
    %57 = arith.mulf %56, %50 : vector<8x128xf32>
    %cst_29 = arith.constant dense<0.000000e+00> : vector<8x192xf32>
    %58 = tpu.matmul %57, %37, %cst_29 {dimension_numbers = #tpu.dot_dimension_numbers<[1], [0], [0], [1], [0, 0, 1, 1], [], []>} : vector<8x128xf32>, vector<128x192xf32>, vector<8x192xf32> -> vector<8x192xf32>
    %59 = arith.addf %33, %58 : vector<8x192xf32>
    %c2 = arith.constant 2 : index
    %c0_30 = arith.constant 0 : index
    %c0_31 = arith.constant 0 : index
    %60 = vector.load %arg5[%c2, %c0_30, %c0_31] : memref<4x192x256xf32, #tpu.memory_space<vmem>>, vector<1x192x256xf32>
    %61 = vector.shape_cast %60 : vector<1x192x256xf32> to vector<192x256xf32>
    %c2_32 = arith.constant 2 : index
    %c0_33 = arith.constant 0 : index
    %c0_34 = arith.constant 0 : index
    %62 = vector.load %arg6[%c2_32, %c0_33, %c0_34] : memref<4x128x192xf32, #tpu.memory_space<vmem>>, vector<1x128x192xf32>
    %63 = vector.shape_cast %62 : vector<1x128x192xf32> to vector<128x192xf32>
    %64 = arith.mulf %59, %59 : vector<8x192xf32>
    %cst_35 = arith.constant dense<0.000000e+00> : vector<8xf32>
    %65 = vector.multi_reduction <add>, %64, %cst_35 [1] : vector<8x192xf32> to vector<8xf32>
    %66 = vector.shape_cast %65 : vector<8xf32> to vector<8x1xf32>
    %cst_36 = arith.constant 1.920000e+02 : f32
    %67 = vector.broadcast %cst_36 : f32 to vector<8x1xf32>
    %68 = arith.divf %66, %67 : vector<8x1xf32>
    %cst_37 = arith.constant 9.99999974E-6 : f32
    %69 = vector.broadcast %cst_37 : f32 to vector<8x1xf32>
    %70 = arith.addf %68, %69 : vector<8x1xf32>
    %71 = math.rsqrt %70 : vector<8x1xf32>
    %72 = vector.broadcast %71 : vector<8x1xf32> to vector<8x192xf32>
    %73 = arith.mulf %59, %72 : vector<8x192xf32>
    %cst_38 = arith.constant dense<0.000000e+00> : vector<8x256xf32>
    %74 = tpu.matmul %73, %61, %cst_38 {dimension_numbers = #tpu.dot_dimension_numbers<[1], [0], [0], [1], [0, 0, 1, 1], [], []>} : vector<8x192xf32>, vector<192x256xf32>, vector<8x256xf32> -> vector<8x256xf32>
    %75 = vector.extract_strided_slice %74 {offsets = [0, 0], sizes = [8, 128], strides = [1, 1]} : vector<8x256xf32> to vector<8x128xf32>
    %76 = vector.extract_strided_slice %74 {offsets = [0, 128], sizes = [8, 128], strides = [1, 1]} : vector<8x256xf32> to vector<8x128xf32>
    %77 = arith.negf %75 : vector<8x128xf32>
    %78 = math.exp %77 : vector<8x128xf32>
    %cst_39 = arith.constant 1.000000e+00 : f32
    %79 = vector.broadcast %cst_39 : f32 to vector<8x128xf32>
    %80 = arith.addf %79, %78 : vector<8x128xf32>
    %81 = arith.divf %79, %80 : vector<8x128xf32>
    %82 = arith.mulf %75, %81 : vector<8x128xf32>
    %83 = arith.mulf %82, %76 : vector<8x128xf32>
    %cst_40 = arith.constant dense<0.000000e+00> : vector<8x192xf32>
    %84 = tpu.matmul %83, %63, %cst_40 {dimension_numbers = #tpu.dot_dimension_numbers<[1], [0], [0], [1], [0, 0, 1, 1], [], []>} : vector<8x128xf32>, vector<128x192xf32>, vector<8x192xf32> -> vector<8x192xf32>
    %85 = arith.addf %59, %84 : vector<8x192xf32>
    %c3 = arith.constant 3 : index
    %c0_41 = arith.constant 0 : index
    %c0_42 = arith.constant 0 : index
    %86 = vector.load %arg5[%c3, %c0_41, %c0_42] : memref<4x192x256xf32, #tpu.memory_space<vmem>>, vector<1x192x256xf32>
    %87 = vector.shape_cast %86 : vector<1x192x256xf32> to vector<192x256xf32>
    %c3_43 = arith.constant 3 : index
    %c0_44 = arith.constant 0 : index
    %c0_45 = arith.constant 0 : index
    %88 = vector.load %arg6[%c3_43, %c0_44, %c0_45] : memref<4x128x192xf32, #tpu.memory_space<vmem>>, vector<1x128x192xf32>
    %89 = vector.shape_cast %88 : vector<1x128x192xf32> to vector<128x192xf32>
    %90 = arith.mulf %85, %85 : vector<8x192xf32>
    %cst_46 = arith.constant dense<0.000000e+00> : vector<8xf32>
    %91 = vector.multi_reduction <add>, %90, %cst_46 [1] : vector<8x192xf32> to vector<8xf32>
    %92 = vector.shape_cast %91 : vector<8xf32> to vector<8x1xf32>
    %cst_47 = arith.constant 1.920000e+02 : f32
    %93 = vector.broadcast %cst_47 : f32 to vector<8x1xf32>
    %94 = arith.divf %92, %93 : vector<8x1xf32>
    %cst_48 = arith.constant 9.99999974E-6 : f32
    %95 = vector.broadcast %cst_48 : f32 to vector<8x1xf32>
    %96 = arith.addf %94, %95 : vector<8x1xf32>
    %97 = math.rsqrt %96 : vector<8x1xf32>
    %98 = vector.broadcast %97 : vector<8x1xf32> to vector<8x192xf32>
    %99 = arith.mulf %85, %98 : vector<8x192xf32>
    %cst_49 = arith.constant dense<0.000000e+00> : vector<8x256xf32>
    %100 = tpu.matmul %99, %87, %cst_49 {dimension_numbers = #tpu.dot_dimension_numbers<[1], [0], [0], [1], [0, 0, 1, 1], [], []>} : vector<8x192xf32>, vector<192x256xf32>, vector<8x256xf32> -> vector<8x256xf32>
    %101 = vector.extract_strided_slice %100 {offsets = [0, 0], sizes = [8, 128], strides = [1, 1]} : vector<8x256xf32> to vector<8x128xf32>
    %102 = vector.extract_strided_slice %100 {offsets = [0, 128], sizes = [8, 128], strides = [1, 1]} : vector<8x256xf32> to vector<8x128xf32>
    %103 = arith.negf %101 : vector<8x128xf32>
    %104 = math.exp %103 : vector<8x128xf32>
    %cst_50 = arith.constant 1.000000e+00 : f32
    %105 = vector.broadcast %cst_50 : f32 to vector<8x128xf32>
    %106 = arith.addf %105, %104 : vector<8x128xf32>
    %107 = arith.divf %105, %106 : vector<8x128xf32>
    %108 = arith.mulf %101, %107 : vector<8x128xf32>
    %109 = arith.mulf %108, %102 : vector<8x128xf32>
    %cst_51 = arith.constant dense<0.000000e+00> : vector<8x192xf32>
    %110 = tpu.matmul %109, %89, %cst_51 {dimension_numbers = #tpu.dot_dimension_numbers<[1], [0], [0], [1], [0, 0, 1, 1], [], []>} : vector<8x128xf32>, vector<128x192xf32>, vector<8x192xf32> -> vector<8x192xf32>
    %111 = arith.addf %85, %110 : vector<8x192xf32>
    %c0_52 = arith.constant 0 : index
    %c0_53 = arith.constant 0 : index
    %112 = vector.load %arg7[%c0_52, %c0_53] : memref<192x128xf32, #tpu.memory_space<vmem>>, vector<192x128xf32>
    %cst_54 = arith.constant dense<0.000000e+00> : vector<8x128xf32>
    %113 = tpu.matmul %111, %112, %cst_54 {dimension_numbers = #tpu.dot_dimension_numbers<[1], [0], [0], [1], [0, 0, 1, 1], [], []>} : vector<8x192xf32>, vector<192x128xf32>, vector<8x128xf32> -> vector<8x128xf32>
    %c0_55 = arith.constant 0 : index
    %c0_56 = arith.constant 0 : index
    %114 = vector.load %arg8[%c0_55, %c0_56] : memref<1x128xf32, #tpu.memory_space<vmem>>, vector<1x128xf32>
    %115 = vector.broadcast %114 : vector<1x128xf32> to vector<8x128xf32>
    %116 = arith.addf %113, %115 : vector<8x128xf32>
    %117 = tpu.iota {dimensions = array<i32: 1>} : vector<8x128xi32>
    %118 = vector.extract_strided_slice %116 {offsets = [0, 9], sizes = [8, 1], strides = [1, 1]} : vector<8x128xf32> to vector<8x1xf32>
    %119 = arith.negf %118 : vector<8x1xf32>
    %120 = math.exp %119 : vector<8x1xf32>
    %cst_57 = arith.constant 1.000000e+00 : f32
    %121 = vector.broadcast %cst_57 : f32 to vector<8x1xf32>
    %122 = arith.addf %121, %120 : vector<8x1xf32>
    %123 = arith.divf %121, %122 : vector<8x1xf32>
    %c9_i32 = arith.constant 9 : i32
    %124 = vector.broadcast %c9_i32 : i32 to vector<8x128xi32>
    %125 = arith.cmpi eq, %117, %124 : vector<8x128xi32>
    %126 = vector.shape_cast %123 : vector<8x1xf32> to vector<8x1xf32>
    %127 = vector.broadcast %126 : vector<8x1xf32> to vector<8x128xf32>
    %128 = arith.select %125, %127, %116 : vector<8x128xi1>, vector<8x128xf32>
    %c0_58 = arith.constant 0 : index
    %c0_59 = arith.constant 0 : index
    %129 = vector.load %arg9[%c0_58, %c0_59] : memref<8x128xf32, #tpu.memory_space<vmem>>, vector<8x128xf32>
    tpu.vector_store %arg9[%c0_58, %c0_59], %128 {strides = array<i32>} : memref<8x128xf32, #tpu.memory_space<vmem>>, vector<8x128xf32>,
    %130 = tpu.iota {dimensions = array<i32: 0>} : vector<8x128xi32>
    %c8_i32 = arith.constant 8 : i32
    %131 = arith.muli %arg0, %c8_i32 : i32
    %132 = vector.broadcast %131 : i32 to vector<8x128xi32>
    %133 = arith.addi %130, %132 : vector<8x128xi32>
    %c8_i32_60 = arith.constant 8 : i32
    %134 = vector.broadcast %c8_i32_60 : i32 to vector<8x128xi32>
    %135 = arith.cmpi slt, %133, %134 : vector<8x128xi32>
    %c9_i32_61 = arith.constant 9 : i32
    %136 = vector.broadcast %c9_i32_61 : i32 to vector<8x128xi32>
    %137 = arith.cmpi slt, %117, %136 : vector<8x128xi32>
    %138 = arith.subf %128, %0 : vector<8x128xf32>
    %139 = arith.subf %128, %0 : vector<8x128xf32>
    %140 = arith.mulf %138, %139 : vector<8x128xf32>
    %141 = arith.andi %135, %137 : vector<8x128xi1>
    %cst_62 = arith.constant 0.000000e+00 : f32
    %142 = vector.broadcast %cst_62 : f32 to vector<8x128xf32>
    %143 = arith.select %141, %140, %142 : vector<8x128xi1>, vector<8x128xf32>
    %144 = vector.shape_cast %143 : vector<8x128xf32> to vector<1x8x128xf32>
    %cst_63 = arith.constant dense<0.000000e+00> : vector<1xf32>
    %145 = vector.multi_reduction <add>, %144, %cst_63 [1, 2] : vector<1x8x128xf32> to vector<1xf32>
    %146 = vector.shape_cast %145 : vector<1xf32> to vector<1x1x1xf32>
    %147 = vector.extract %146[0, 0, 0] : f32 from vector<1x1x1xf32>
    %148 = vector.extract_strided_slice %128 {offsets = [0, 9], sizes = [8, 1], strides = [1, 1]} : vector<8x128xf32> to vector<8x1xf32>
    %149 = vector.extract_strided_slice %0 {offsets = [0, 9], sizes = [8, 1], strides = [1, 1]} : vector<8x128xf32> to vector<8x1xf32>
    %150 = math.log %148 : vector<8x1xf32>
    %cst_64 = arith.constant -1.000000e+02 : f32
    %151 = vector.broadcast %cst_64 : f32 to vector<8x1xf32>
    %152 = arith.maximumf %150, %151 : vector<8x1xf32>
    %cst_65 = arith.constant 1.000000e+00 : f32
    %153 = vector.broadcast %cst_65 : f32 to vector<8x1xf32>
    %154 = arith.subf %153, %148 : vector<8x1xf32>
    %155 = math.log %154 : vector<8x1xf32>
    %cst_66 = arith.constant -1.000000e+02 : f32
    %156 = vector.broadcast %cst_66 : f32 to vector<8x1xf32>
    %157 = arith.maximumf %155, %156 : vector<8x1xf32>
    %158 = arith.mulf %149, %152 : vector<8x1xf32>
    %cst_67 = arith.constant 1.000000e+00 : f32
    %159 = vector.broadcast %cst_67 : f32 to vector<8x1xf32>
    %160 = arith.subf %159, %149 : vector<8x1xf32>
    %161 = arith.mulf %160, %157 : vector<8x1xf32>
    %162 = arith.addf %158, %161 : vector<8x1xf32>
    %cst_68 = arith.constant 0.000000e+00 : f32
    %163 = vector.broadcast %cst_68 : f32 to vector<8x1xf32>
    %164 = arith.subf %163, %162 : vector<8x1xf32>
    %165 = vector.extract_strided_slice %135 {offsets = [0, 0], sizes = [8, 1], strides = [1, 1]} : vector<8x128xi1> to vector<8x1xi1>
    %cst_69 = arith.constant 0.000000e+00 : f32
    %166 = vector.broadcast %cst_69 : f32 to vector<8x1xf32>
    %167 = arith.select %165, %164, %166 : vector<8x1xi1>, vector<8x1xf32>
    %168 = vector.shape_cast %167 : vector<8x1xf32> to vector<1x8x1xf32>
    %cst_70 = arith.constant dense<0.000000e+00> : vector<1xf32>
    %169 = vector.multi_reduction <add>, %168, %cst_70 [1, 2] : vector<1x8x1xf32> to vector<1xf32>
    %170 = vector.shape_cast %169 : vector<1xf32> to vector<1x1x1xf32>
    %171 = vector.extract %170[0, 0, 0] : f32 from vector<1x1x1xf32>
    %172 = tpu.iota {dimensions = array<i32: 1>} : vector<8x128xi32>
    %c0_i32 = arith.constant 0 : i32
    %173 = vector.broadcast %c0_i32 : i32 to vector<8x128xi32>
    %174 = arith.cmpi eq, %172, %173 : vector<8x128xi32>
    %c1_i32 = arith.constant 1 : i32
    %175 = vector.broadcast %c1_i32 : i32 to vector<8x128xi32>
    %176 = arith.cmpi eq, %172, %175 : vector<8x128xi32>
    %cst_71 = arith.constant 0.000000e+00 : f32
    %177 = vector.broadcast %171 : f32 to vector<8x128xf32>
    %178 = vector.broadcast %cst_71 : f32 to vector<8x128xf32>
    %179 = arith.select %176, %177, %178 : vector<8x128xi1>, vector<8x128xf32>
    %180 = vector.broadcast %147 : f32 to vector<8x128xf32>
    %181 = arith.select %174, %180, %179 : vector<8x128xi1>, vector<8x128xf32>
    %c0_72 = arith.constant 0 : index
    %c0_73 = arith.constant 0 : index
    %c0_74 = arith.constant 0 : index
    %182 = vector.load %arg10[%c0_72, %c0_73, %c0_74] : memref<1x8x128xf32, #tpu.memory_space<vmem>>, vector<1x8x128xf32>
    %183 = vector.shape_cast %182 : vector<1x8x128xf32> to vector<8x128xf32>
    %184 = vector.shape_cast %181 : vector<8x128xf32> to vector<1x8x128xf32>
    tpu.vector_store %arg10[%c0_72, %c0_73, %c0_74], %184 {strides = array<i32>} : memref<1x8x128xf32, #tpu.memory_space<vmem>>, vector<1x8x128xf32>,
    return
  }
  func.func @transform_0(%arg0: i32) -> (i32, i32) {
    %c0_i32 = arith.constant 0 : i32
    %c0_i32_0 = arith.constant 0 : i32
    return %arg0, %c0_i32 : i32, i32
  }
  func.func @transform_1(%arg0: i32) -> (i32, i32) {
    %c0_i32 = arith.constant 0 : i32
    %c0_i32_0 = arith.constant 0 : i32
    return %arg0, %c0_i32 : i32, i32
  }
  func.func @transform_2(%arg0: i32) -> (i32, i32) {
    %c0_i32 = arith.constant 0 : i32
    %c0_i32_0 = arith.constant 0 : i32
    %c0_i32_1 = arith.constant 0 : i32
    return %c0_i32, %c0_i32_0 : i32, i32
  }
  func.func @transform_3(%arg0: i32) -> (i32, i32) {
    %c0_i32 = arith.constant 0 : i32
    %c0_i32_0 = arith.constant 0 : i32
    %c0_i32_1 = arith.constant 0 : i32
    return %c0_i32, %c0_i32_0 : i32, i32
  }
  func.func @transform_4(%arg0: i32) -> (i32, i32, i32) {
    %c0_i32 = arith.constant 0 : i32
    %c0_i32_0 = arith.constant 0 : i32
    %c0_i32_1 = arith.constant 0 : i32
    %c0_i32_2 = arith.constant 0 : i32
    return %c0_i32, %c0_i32_0, %c0_i32_1 : i32, i32, i32
  }
  func.func @transform_5(%arg0: i32) -> (i32, i32, i32) {
    %c0_i32 = arith.constant 0 : i32
    %c0_i32_0 = arith.constant 0 : i32
    %c0_i32_1 = arith.constant 0 : i32
    %c0_i32_2 = arith.constant 0 : i32
    return %c0_i32, %c0_i32_0, %c0_i32_1 : i32, i32, i32
  }
  func.func @transform_6(%arg0: i32) -> (i32, i32) {
    %c0_i32 = arith.constant 0 : i32
    %c0_i32_0 = arith.constant 0 : i32
    %c0_i32_1 = arith.constant 0 : i32
    return %c0_i32, %c0_i32_0 : i32, i32
  }
  func.func @transform_7(%arg0: i32) -> (i32, i32) {
    %c0_i32 = arith.constant 0 : i32
    %c0_i32_0 = arith.constant 0 : i32
    %c0_i32_1 = arith.constant 0 : i32
    return %c0_i32, %c0_i32_0 : i32, i32
  }
  func.func @transform_8(%arg0: i32) -> (i32, i32) {
    %c0_i32 = arith.constant 0 : i32
    %c0_i32_0 = arith.constant 0 : i32
    return %arg0, %c0_i32 : i32, i32
  }
  func.func @transform_9(%arg0: i32) -> (i32, i32, i32) {
    %c0_i32 = arith.constant 0 : i32
    %c0_i32_0 = arith.constant 0 : i32
    %c0_i32_1 = arith.constant 0 : i32
    return %arg0, %c0_i32, %c0_i32_0 : i32, i32, i32
  }
}

</mosaic_0001>

<llo_original>
// kernel: tpu_custom_call.1
$region0: #{tpu_custom_call.1}
  #allocation0 [shape = 'u32[]', space=smem, size = 0x4, offset = 0x4, fixed_abs, tag = 'smem constant byte address 0x4 - core index']
  #allocation1 [shape = 'u32[144,128]{1,0:T(1,128)}', space=vmem, size = 0x12000, scoped, tag = 'internal scratch']
  %s0 = inlined_call_operand.vmem [shape: f32[8,128], index: 0, kind: input, shape index: {}]
  %s1 = inlined_call_operand.vmem [shape: f32[8,128], index: 1, kind: input, shape index: {}]
  %s2 = inlined_call_operand.vmem [shape: f32[128,192], index: 2, kind: input, shape index: {}]
  %s3 = inlined_call_operand.vmem [shape: f32[1,192], index: 3, kind: input, shape index: {}]
  %s4 = inlined_call_operand.vmem [shape: f32[4,192,256], index: 4, kind: input, shape index: {}]
  %s5 = inlined_call_operand.vmem [shape: f32[4,128,192], index: 5, kind: input, shape index: {}]
  %s6 = inlined_call_operand.vmem [shape: f32[192,128], index: 6, kind: input, shape index: {}]
  %s7 = inlined_call_operand.vmem [shape: f32[1,128], index: 7, kind: input, shape index: {}]
  %s8 = inlined_call_operand.hbm [shape: f32[8,128], index: 8, kind: output, shape index: {0}]
  %s9 = inlined_call_operand.hbm [shape: f32[1,8,128], index: 9, kind: output, shape index: {1}]
  %10 = xla_tuple %s8, %s9
  %s11 = sld [smem:[#allocation0]]
  $region50: #{tpu_custom_call.1} parent=0
    _
  %s13 = ssub.s32 1, %s11
  %s14 = scalar_select 0, %s13, %s11
  $region1: #{tpu_custom_call.1} parent=0
    #allocation2 [shape = 'u8[4096]{0}', space=vmem, size = 0x1000, scoped, tag = 'output window, operand 0, single buffered']
    #allocation3 [shape = 's32[1]{0}', space=sflag, size = 0x4, scoped, tag = 'scoped memory for tpu_custom_call.1']
    #allocation4 [shape = 'u8[4096]{0}', space=vmem, size = 0x1000, scoped, tag = 'output window, operand 1, single buffered']
    #allocation5 [shape = 's32[1]{0}', space=sflag, size = 0x4, scoped, tag = 'scoped memory for tpu_custom_call.1']
    %15 = vsyncpa [#allocation3], 0
    %16 = vsyncpa [#allocation5], 0
    // Predicated region
    $region2: #{tpu_custom_call.1} parent=1 // pred_check
      _
    $region3: #{tpu_custom_call.1} parent=1 // pred_check_branch
      %18 = sbr.rel (0) target = $region5
    $region4: #{tpu_custom_call.1} parent=1 // pred_region
      _
    $region5: #{tpu_custom_call.1} parent=1 // pred_fallthru
      _
    // Predicated region
    $region6: #{tpu_custom_call.1} parent=1 // pred_check
      _
    $region7: #{tpu_custom_call.1} parent=1 // pred_check_branch
      %20 = sbr.rel (0) target = $region9
    $region8: #{tpu_custom_call.1} parent=1 // pred_region
      _
    $region9: #{tpu_custom_call.1} parent=1 // pred_fallthru
      _
    // Predicated region
    $region10: #{tpu_custom_call.1} parent=1 // pred_check
      _
    $region11: #{tpu_custom_call.1} parent=1 // pred_check_branch
      %22 = sbr.rel (0) target = $region13
    $region12: #{tpu_custom_call.1} parent=1 // pred_region
      _
    $region13: #{tpu_custom_call.1} parent=1 // pred_fallthru
      _
    // Predicated region
    $region14: #{tpu_custom_call.1} parent=1 // pred_check
      _
    $region15: #{tpu_custom_call.1} parent=1 // pred_check_branch
      %24 = sbr.rel (0) target = $region17
    $region16: #{tpu_custom_call.1} parent=1 // pred_region
      _
    $region17: #{tpu_custom_call.1} parent=1 // pred_fallthru
      _
    // Predicated region
    $region18: #{tpu_custom_call.1} parent=1 // pred_check
      _
    $region19: #{tpu_custom_call.1} parent=1 // pred_check_branch
      %26 = sbr.rel (0) target = $region21
    $region20: #{tpu_custom_call.1} parent=1 // pred_region
      _
    $region21: #{tpu_custom_call.1} parent=1 // pred_fallthru
      _
    // Predicated region
    $region22: #{tpu_custom_call.1} parent=1 // pred_check
      _
    $region23: #{tpu_custom_call.1} parent=1 // pred_check_branch
      %28 = sbr.rel (0) target = $region25
    $region24: #{tpu_custom_call.1} parent=1 // pred_region
      _
    $region25: #{tpu_custom_call.1} parent=1 // pred_fallthru
      _
    // Predicated region
    $region26: #{tpu_custom_call.1} parent=1 // pred_check
      _
    $region27: #{tpu_custom_call.1} parent=1 // pred_check_branch
      %30 = sbr.rel (0) target = $region29
    $region28: #{tpu_custom_call.1} parent=1 // pred_region
      _
    $region29: #{tpu_custom_call.1} parent=1 // pred_fallthru
      _
    // Predicated region
    $region30: #{tpu_custom_call.1} parent=1 // pred_check
      _
    $region31: #{tpu_custom_call.1} parent=1 // pred_check_branch
      %32 = sbr.rel (0) target = $region33
    $region32: #{tpu_custom_call.1} parent=1 // pred_region
      _
    $region33: #{tpu_custom_call.1} parent=1 // pred_fallthru
      _
    %v33 = vld [vmem:[%s0] sm:$0xff]
    %v34 = vld [vmem:[%s1] sm:$0xff]
    %v35 = vmul.f32 %v33, %v34
    %v36 = vld [vmem:[%s2] sm:$0xff]
    %v37 = vld [vmem:[%s2 + $0x8] sm:$0xff]
    %v38 = vld [vmem:[%s2 + $0x10] sm:$0xff]
    %v39 = vld [vmem:[%s2 + $0x18] sm:$0xff]
    %v40 = vld [vmem:[%s2 + $0x20] sm:$0xff]
    %v41 = vld [vmem:[%s2 + $0x28] sm:$0xff]
    %v42 = vld [vmem:[%s2 + $0x30] sm:$0xff]
    %v43 = vld [vmem:[%s2 + $0x38] sm:$0xff]
    %v44 = vld [vmem:[%s2 + $0x40] sm:$0xff]
    %v45 = vld [vmem:[%s2 + $0x48] sm:$0xff]
    %v46 = vld [vmem:[%s2 + $0x50] sm:$0xff]
    %v47 = vld [vmem:[%s2 + $0x58] sm:$0xff]
    %v48 = vld [vmem:[%s2 + $0x60] sm:$0xff]
    %v49 = vld [vmem:[%s2 + $0x68] sm:$0xff]
    %v50 = vld [vmem:[%s2 + $0x70] sm:$0xff]
    %v51 = vld [vmem:[%s2 + $0x78] sm:$0xff]
    %v52 = vld [vmem:[%s2 + $0x80] sm:$0xff]
    %v53 = vld [vmem:[%s2 + $0x88] sm:$0xff]
    %v54 = vld [vmem:[%s2 + $0x90] sm:$0xff]
    %v55 = vld [vmem:[%s2 + $0x98] sm:$0xff]
    %v56 = vld [vmem:[%s2 + $0xa0] sm:$0xff]
    %v57 = vld [vmem:[%s2 + $0xa8] sm:$0xff]
    %v58 = vld [vmem:[%s2 + $0xb0] sm:$0xff]
    %v59 = vld [vmem:[%s2 + $0xb8] sm:$0xff]
    %v60 = vld [vmem:[%s2 + $0xc0] sm:$0xff]
    %v61 = vld [vmem:[%s2 + $0xc8] sm:$0xff]
    %v62 = vld [vmem:[%s2 + $0xd0] sm:$0xff]
    %v63 = vld [vmem:[%s2 + $0xd8] sm:$0xff]
    %v64 = vld [vmem:[%s2 + $0xe0] sm:$0xff]
    %v65 = vld [vmem:[%s2 + $0xe8] sm:$0xff]
    %v66 = vld [vmem:[%s2 + $0xf0] sm:$0xff]
    %v67 = vld [vmem:[%s2 + $0xf8] sm:$0xff]
    %v68 = vld [vmem:[%s3] sm:$0x3]
    %v70 = vlaneseq
    %v71 = vshrl.u32 %v70, 7
    %v72 = vsub.s32 0, %v71
    %v73 = vrot.slane %v68, %v72
    %v74 = vlaneseq
    %v75 = vshrl.u32 %v74, 7
    %v76 = vsub.s32 1, %v75
    %v77 = vrot.slane %v68, %v76
    %80 = vmatprep.subr.mxu0 %v67
    %81 = vmatpush1.msra.mxu0 %v66
    %82 = vmatprep.subr.mxu0 %v65
    %83 = vmatpush1.msra.mxu0 %v64
    %84 = vmatprep.subr.mxu0 %v63
    %85 = vmatpush1.msra.mxu0 %v62
    %86 = vmatprep.subr.mxu0 %v61
    %87 = vmatpush1.msra.mxu0 %v60
    %88 = vmatprep.subr.mxu0 %v59
    %89 = vmatpush1.msra.mxu0 %v58
    %90 = vmatprep.subr.mxu0 %v57
    %91 = vmatpush1.msra.mxu0 %v56
    %92 = vmatprep.subr.mxu0 %v55
    %93 = vmatpush1.msra.mxu0 %v54
    %94 = vmatprep.subr.mxu0 %v53
    %95 = vmatpush1.msra.mxu0 %v52
    %96 = vmatprep.subr.mxu0 %v51
    %97 = vmatpush1.msra.mxu0 %v50
    %98 = vmatprep.subr.mxu0 %v49
    %99 = vmatpush1.msra.mxu0 %v48
    %100 = vmatprep.subr.mxu0 %v47
    %101 = vmatpush1.msra.mxu0 %v46
    %102 = vmatprep.subr.mxu0 %v45
    %103 = vmatpush1.msra.mxu0 %v44
    %104 = vmatprep.subr.mxu0 %v43
    %105 = vmatpush1.msra.mxu0 %v42
    %106 = vmatprep.subr.mxu0 %v41
    %107 = vmatpush1.msra.mxu0 %v40
    %108 = vmatprep.subr.mxu0 %v39
    %109 = vmatpush1.msra.mxu0 %v38
    %110 = vmatprep.subr.mxu0 %v37
    %111 = vmatpush1.msra.mxu0 %v36
    %112 = vmatprep.subr.mxu0 0.0
    %113 = vmatpush2.msra.mxu0 0.0
    %114 = vmatprep.subr.mxu0 0.0
    %115 = vmatpush2.msra.mxu0 0.0
    %116 = vmatprep.subr.mxu0 0.0
    %117 = vmatpush2.msra.mxu0 0.0
    %118 = vmatprep.subr.mxu0 0.0
    %119 = vmatpush2.msra.mxu0 0.0
    %120 = vmatprep.subr.mxu0 0.0
    %121 = vmatpush2.msra.mxu0 0.0
    %122 = vmatprep.subr.mxu0 0.0
    %123 = vmatpush2.msra.mxu0 0.0
    %124 = vmatprep.subr.mxu0 0.0
    %125 = vmatpush2.msra.mxu0 0.0
    %126 = vmatprep.subr.mxu0 0.0
    %127 = vmatpush2.msra.mxu0 0.0
    %128 = vmatprep.subr.mxu0 0.0
    %129 = vmatpush2.msra.mxu0 0.0
    %130 = vmatprep.subr.mxu0 0.0
    %131 = vmatpush2.msra.mxu0 0.0
    %132 = vmatprep.subr.mxu0 0.0
    %133 = vmatpush2.msra.mxu0 0.0
    %134 = vmatprep.subr.mxu0 0.0
    %135 = vmatpush2.msra.mxu0 0.0
    %136 = vmatprep.subr.mxu0 0.0
    %137 = vmatpush2.msra.mxu0 0.0
    %138 = vmatprep.subr.mxu0 0.0
    %139 = vmatpush2.msra.mxu0 0.0
    %140 = vmatprep.subr.mxu0 0.0
    %141 = vmatpush2.msra.mxu0 0.0
    %142 = vmatprep.subr.mxu0 0.0
    %143 = vmatpush2.msra.mxu0 0.0
    %144 = vmatprep.mubr.f32.mxu0 0.0
    %145 = vmatmul.mubr.f32.gmra.mxu0 %v35
    %v146 = vpop.f32.mrf.mxu0
    %v147 = vadd.f32 %v73, %v146
    %v148 = vpop.f32.mrf.mxu0
    %v149 = vadd.f32 %v77, %v148
    %150 = vdwg.mxu0
    %v151 = vld [vmem:[%s4] sm:$0xff]
    %v152 = vld [vmem:[%s4 + $0x8] sm:$0xff]
    %v153 = vld [vmem:[%s4 + $0x10] sm:$0xff]
    %v154 = vld [vmem:[%s4 + $0x18] sm:$0xff]
    %v155 = vld [vmem:[%s4 + $0x20] sm:$0xff]
    %v156 = vld [vmem:[%s4 + $0x28] sm:$0xff]
    %v157 = vld [vmem:[%s4 + $0x30] sm:$0xff]
    %v158 = vld [vmem:[%s4 + $0x38] sm:$0xff]
    %v159 = vld [vmem:[%s4 + $0x40] sm:$0xff]
    %v160 = vld [vmem:[%s4 + $0x48] sm:$0xff]
    %v161 = vld [vmem:[%s4 + $0x50] sm:$0xff]
    %v162 = vld [vmem:[%s4 + $0x58] sm:$0xff]
    %v163 = vld [vmem:[%s4 + $0x60] sm:$0xff]
    %v164 = vld [vmem:[%s4 + $0x68] sm:$0xff]
    %v165 = vld [vmem:[%s4 + $0x70] sm:$0xff]
    %v166 = vld [vmem:[%s4 + $0x78] sm:$0xff]
    %v167 = vld [vmem:[%s4 + $0x80] sm:$0xff]
    %v168 = vld [vmem:[%s4 + $0x88] sm:$0xff]
    %v169 = vld [vmem:[%s4 + $0x90] sm:$0xff]
    %v170 = vld [vmem:[%s4 + $0x98] sm:$0xff]
    %v171 = vld [vmem:[%s4 + $0xa0] sm:$0xff]
    %v172 = vld [vmem:[%s4 + $0xa8] sm:$0xff]
    %v173 = vld [vmem:[%s4 + $0xb0] sm:$0xff]
    %v174 = vld [vmem:[%s4 + $0xb8] sm:$0xff]
    %v175 = vld [vmem:[%s4 + $0xc0] sm:$0xff]
    %v176 = vld [vmem:[%s4 + $0xc8] sm:$0xff]
    %v177 = vld [vmem:[%s4 + $0xd0] sm:$0xff]
    %v178 = vld [vmem:[%s4 + $0xd8] sm:$0xff]
    %v179 = vld [vmem:[%s4 + $0xe0] sm:$0xff]
    %v180 = vld [vmem:[%s4 + $0xe8] sm:$0xff]
    %v181 = vld [vmem:[%s4 + $0xf0] sm:$0xff]
    %v182 = vld [vmem:[%s4 + $0xf8] sm:$0xff]
    %v183 = vld [vmem:[%s4 + $0x100] sm:$0xff]
    %v184 = vld [vmem:[%s4 + $0x108] sm:$0xff]
    %v185 = vld [vmem:[%s4 + $0x110] sm:$0xff]
    %v186 = vld [vmem:[%s4 + $0x118] sm:$0xff]
    %v187 = vld [vmem:[%s4 + $0x120] sm:$0xff]
    %v188 = vld [vmem:[%s4 + $0x128] sm:$0xff]
    %v189 = vld [vmem:[%s4 + $0x130] sm:$0xff]
    %v190 = vld [vmem:[%s4 + $0x138] sm:$0xff]
    %v191 = vld [vmem:[%s4 + $0x140] sm:$0xff]
    %v192 = vld [vmem:[%s4 + $0x148] sm:$0xff]
    %v193 = vld [vmem:[%s4 + $0x150] sm:$0xff]
    %v194 = vld [vmem:[%s4 + $0x158] sm:$0xff]
    %v195 = vld [vmem:[%s4 + $0x160] sm:$0xff]
    %v196 = vld [vmem:[%s4 + $0x168] sm:$0xff]
    %v197 = vld [vmem:[%s4 + $0x170] sm:$0xff]
    %v198 = vld [vmem:[%s4 + $0x178] sm:$0xff]
    %v199 = vld [vmem:[%s5] sm:$0xff]
    %v200 = vld [vmem:[%s5 + $0x8] sm:$0xff]
    %v201 = vld [vmem:[%s5 + $0x10] sm:$0xff]
    %v202 = vld [vmem:[%s5 + $0x18] sm:$0xff]
    %v203 = vld [vmem:[%s5 + $0x20] sm:$0xff]
    %v204 = vld [vmem:[%s5 + $0x28] sm:$0xff]
    %v205 = vld [vmem:[%s5 + $0x30] sm:$0xff]
    %v206 = vld [vmem:[%s5 + $0x38] sm:$0xff]
    %v207 = vld [vmem:[%s5 + $0x40] sm:$0xff]
    %v208 = vld [vmem:[%s5 + $0x48] sm:$0xff]
    %v209 = vld [vmem:[%s5 + $0x50] sm:$0xff]
    %v210 = vld [vmem:[%s5 + $0x58] sm:$0xff]
    %v211 = vld [vmem:[%s5 + $0x60] sm:$0xff]
    %v212 = vld [vmem:[%s5 + $0x68] sm:$0xff]
    %v213 = vld [vmem:[%s5 + $0x70] sm:$0xff]
    %v214 = vld [vmem:[%s5 + $0x78] sm:$0xff]
    %v215 = vld [vmem:[%s5 + $0x80] sm:$0xff]
    %v216 = vld [vmem:[%s5 + $0x88] sm:$0xff]
    %v217 = vld [vmem:[%s5 + $0x90] sm:$0xff]
    %v218 = vld [vmem:[%s5 + $0x98] sm:$0xff]
    %v219 = vld [vmem:[%s5 + $0xa0] sm:$0xff]
    %v220 = vld [vmem:[%s5 + $0xa8] sm:$0xff]
    %v221 = vld [vmem:[%s5 + $0xb0] sm:$0xff]
    %v222 = vld [vmem:[%s5 + $0xb8] sm:$0xff]
    %v223 = vld [vmem:[%s5 + $0xc0] sm:$0xff]
    %v224 = vld [vmem:[%s5 + $0xc8] sm:$0xff]
    %v225 = vld [vmem:[%s5 + $0xd0] sm:$0xff]
    %v226 = vld [vmem:[%s5 + $0xd8] sm:$0xff]
    %v227 = vld [vmem:[%s5 + $0xe0] sm:$0xff]
    %v228 = vld [vmem:[%s5 + $0xe8] sm:$0xff]
    %v229 = vld [vmem:[%s5 + $0xf0] sm:$0xff]
    %v230 = vld [vmem:[%s5 + $0xf8] sm:$0xff]
    %v231 = vmul.f32 %v147, %v147
    %v232 = vmul.f32 %v149, %v149
    %vm233 = vcmask 523264
    %v234 = vsel %vm233, %v232, 0.0
    %v235 = vadd.f32 %v231, %v234
    %236 = vadd.xlane.f32.xlu0 %v235
    %v237 = vpop.xlane.xlu0 %236
    %v238 = vrcp.pop 192.0
    %v239 = vmul.f32 %v237, %v238
    %v240 = vadd.f32 %v239, 1e-05
    %v241 = vrsqrt.pop %v240
    %v242 = vmul.f32 %v147, %v241
    %v243 = vmul.f32 %v149, %v241
    %v245 = vsel %vm233, %v243, 0
    %247 = vmatprep.subr.mxu0 %v182
    %248 = vmatpush1.msra.mxu0 %v181
    %249 = vmatprep.subr.mxu0 %v180
    %250 = vmatpush1.msra.mxu0 %v179
    %251 = vmatprep.subr.mxu0 %v178
    %252 = vmatpush1.msra.mxu0 %v177
    %253 = vmatprep.subr.mxu0 %v176
    %254 = vmatpush1.msra.mxu0 %v175
    %255 = vmatprep.subr.mxu0 %v174
    %256 = vmatpush1.msra.mxu0 %v173
    %257 = vmatprep.subr.mxu0 %v172
    %258 = vmatpush1.msra.mxu0 %v171
    %259 = vmatprep.subr.mxu0 %v170
    %260 = vmatpush1.msra.mxu0 %v169
    %261 = vmatprep.subr.mxu0 %v168
    %262 = vmatpush1.msra.mxu0 %v167
    %263 = vmatprep.subr.mxu0 %v166
    %264 = vmatpush1.msra.mxu0 %v165
    %265 = vmatprep.subr.mxu0 %v164
    %266 = vmatpush1.msra.mxu0 %v163
    %267 = vmatprep.subr.mxu0 %v162
    %268 = vmatpush1.msra.mxu0 %v161
    %269 = vmatprep.subr.mxu0 %v160
    %270 = vmatpush1.msra.mxu0 %v159
    %271 = vmatprep.subr.mxu0 %v158
    %272 = vmatpush1.msra.mxu0 %v157
    %273 = vmatprep.subr.mxu0 %v156
    %274 = vmatpush1.msra.mxu0 %v155
    %275 = vmatprep.subr.mxu0 %v154
    %276 = vmatpush1.msra.mxu0 %v153
    %277 = vmatprep.subr.mxu0 %v152
    %278 = vmatpush1.msra.mxu0 %v151
    %279 = vmatprep.subr.mxu0 0.0
    %280 = vmatpush2.msra.mxu0 0.0
    %281 = vmatprep.subr.mxu0 0.0
    %282 = vmatpush2.msra.mxu0 0.0
    %283 = vmatprep.subr.mxu0 0.0
    %284 = vmatpush2.msra.mxu0 0.0
    %285 = vmatprep.subr.mxu0 0.0
    %286 = vmatpush2.msra.mxu0 0.0
    %287 = vmatprep.subr.mxu0 0.0
    %288 = vmatpush2.msra.mxu0 0.0
    %289 = vmatprep.subr.mxu0 0.0
    %290 = vmatpush2.msra.mxu0 0.0
    %291 = vmatprep.subr.mxu0 0.0
    %292 = vmatpush2.msra.mxu0 0.0
    %293 = vmatprep.subr.mxu0 0.0
    %294 = vmatpush2.msra.mxu0 0.0
    %295 = vmatprep.subr.mxu0 %v198
    %296 = vmatpush2.msra.mxu0 %v197
    %297 = vmatprep.subr.mxu0 %v196
    %298 = vmatpush2.msra.mxu0 %v195
    %299 = vmatprep.subr.mxu0 %v194
    %300 = vmatpush2.msra.mxu0 %v193
    %301 = vmatprep.subr.mxu0 %v192
    %302 = vmatpush2.msra.mxu0 %v191
    %303 = vmatprep.subr.mxu0 %v190
    %304 = vmatpush2.msra.mxu0 %v189
    %305 = vmatprep.subr.mxu0 %v188
    %306 = vmatpush2.msra.mxu0 %v187
    %307 = vmatprep.subr.mxu0 %v186
    %308 = vmatpush2.msra.mxu0 %v185
    %309 = vmatprep.subr.mxu0 %v184
    %310 = vmatpush2.msra.mxu0 %v183
    %311 = vmatprep.mubr.f32.mxu0 %v245
    %312 = vmatmul.mubr.f32.gmra.mxu0 %v242
    %v313 = vpop.f32.mrf.mxu0
    %v314 = vadd.f32 0.0, %v313
    %v315 = vpop.f32.mrf.mxu0
    %v316 = vadd.f32 0.0, %v315
    %317 = vdwg.mxu0
    %v318 = vxor.u32 %v314, 2147483648
    %v319 = vmul.f32 %v318, 1.442695
    %v320 = vpow.pop %v319
    %v321 = vadd.f32 %v320, 1.0
    %v322 = vrcp.pop %v321
    %v323 = vmul.f32 1.0, %v322
    %v324 = vmul.f32 %v314, %v323
    %v325 = vmul.f32 %v324, %v316
    %326 = vmatprep.subr.mxu0 %v230
    %327 = vmatpush1.msra.mxu0 %v229
    %328 = vmatprep.subr.mxu0 %v228
    %329 = vmatpush1.msra.mxu0 %v227
    %330 = vmatprep.subr.mxu0 %v226
    %331 = vmatpush1.msra.mxu0 %v225
    %332 = vmatprep.subr.mxu0 %v224
    %333 = vmatpush1.msra.mxu0 %v223
    %334 = vmatprep.subr.mxu0 %v222
    %335 = vmatpush1.msra.mxu0 %v221
    %336 = vmatprep.subr.mxu0 %v220
    %337 = vmatpush1.msra.mxu0 %v219
    %338 = vmatprep.subr.mxu0 %v218
    %339 = vmatpush1.msra.mxu0 %v217
    %340 = vmatprep.subr.mxu0 %v216
    %341 = vmatpush1.msra.mxu0 %v215
    %342 = vmatprep.subr.mxu0 %v214
    %343 = vmatpush1.msra.mxu0 %v213
    %344 = vmatprep.subr.mxu0 %v212
    %345 = vmatpush1.msra.mxu0 %v211
    %346 = vmatprep.subr.mxu0 %v210
    %347 = vmatpush1.msra.mxu0 %v209
    %348 = vmatprep.subr.mxu0 %v208
    %349 = vmatpush1.msra.mxu0 %v207
    %350 = vmatprep.subr.mxu0 %v206
    %351 = vmatpush1.msra.mxu0 %v205
    %352 = vmatprep.subr.mxu0 %v204
    %353 = vmatpush1.msra.mxu0 %v203
    %354 = vmatprep.subr.mxu0 %v202
    %355 = vmatpush1.msra.mxu0 %v201
    %356 = vmatprep.subr.mxu0 %v200
    %357 = vmatpush1.msra.mxu0 %v199
    %358 = vmatprep.subr.mxu0 0.0
    %359 = vmatpush2.msra.mxu0 0.0
    %360 = vmatprep.subr.mxu0 0.0
    %361 = vmatpush2.msra.mxu0 0.0
    %362 = vmatprep.subr.mxu0 0.0
    %363 = vmatpush2.msra.mxu0 0.0
    %364 = vmatprep.subr.mxu0 0.0
    %365 = vmatpush2.msra.mxu0 0.0
    %366 = vmatprep.subr.mxu0 0.0
    %367 = vmatpush2.msra.mxu0 0.0
    %368 = vmatprep.subr.mxu0 0.0
    %369 = vmatpush2.msra.mxu0 0.0
    %370 = vmatprep.subr.mxu0 0.0
    %371 = vmatpush2.msra.mxu0 0.0
    %372 = vmatprep.subr.mxu0 0.0
    %373 = vmatpush2.msra.mxu0 0.0
    %374 = vmatprep.subr.mxu0 0.0
    %375 = vmatpush2.msra.mxu0 0.0
    %376 = vmatprep.subr.mxu0 0.0
    %377 = vmatpush2.msra.mxu0 0.0
    %378 = vmatprep.subr.mxu0 0.0
    %379 = vmatpush2.msra.mxu0 0.0
    %380 = vmatprep.subr.mxu0 0.0
    %381 = vmatpush2.msra.mxu0 0.0
    %382 = vmatprep.subr.mxu0 0.0
    %383 = vmatpush2.msra.mxu0 0.0
    %384 = vmatprep.subr.mxu0 0.0
    %385 = vmatpush2.msra.mxu0 0.0
    %386 = vmatprep.subr.mxu0 0.0
    %387 = vmatpush2.msra.mxu0 0.0
    %388 = vmatprep.subr.mxu0 0.0
    %389 = vmatpush2.msra.mxu0 0.0
    %390 = vmatprep.mubr.f32.mxu0 0.0
    %391 = vmatmul.mubr.f32.gmra.mxu0 %v325
    %v392 = vpop.f32.mrf.mxu0
    %v393 = vadd.f32 0.0, %v392
    %v394 = vpop.f32.mrf.mxu0
    %v395 = vadd.f32 0.0, %v394
    %396 = vdwg.mxu0
    %v397 = vadd.f32 %v147, %v393
    %v398 = vadd.f32 %v149, %v395
    %s399 = scalar_lea.vmem %s4, 384
    %v400 = vld [vmem:[%s399] sm:$0xff]
    %v401 = vld [vmem:[%s399 + $0x8] sm:$0xff]
    %v402 = vld [vmem:[%s399 + $0x10] sm:$0xff]
    %v403 = vld [vmem:[%s399 + $0x18] sm:$0xff]
    %v404 = vld [vmem:[%s399 + $0x20] sm:$0xff]
    %v405 = vld [vmem:[%s399 + $0x28] sm:$0xff]
    %v406 = vld [vmem:[%s399 + $0x30] sm:$0xff]
    %v407 = vld [vmem:[%s399 + $0x38] sm:$0xff]
    %v408 = vld [vmem:[%s399 + $0x40] sm:$0xff]
    %v409 = vld [vmem:[%s399 + $0x48] sm:$0xff]
    %v410 = vld [vmem:[%s399 + $0x50] sm:$0xff]
    %v411 = vld [vmem:[%s399 + $0x58] sm:$0xff]
    %v412 = vld [vmem:[%s399 + $0x60] sm:$0xff]
    %v413 = vld [vmem:[%s399 + $0x68] sm:$0xff]
    %v414 = vld [vmem:[%s399 + $0x70] sm:$0xff]
    %v415 = vld [vmem:[%s399 + $0x78] sm:$0xff]
    %v416 = vld [vmem:[%s399 + $0x80] sm:$0xff]
    %v417 = vld [vmem:[%s399 + $0x88] sm:$0xff]
    %v418 = vld [vmem:[%s399 + $0x90] sm:$0xff]
    %v419 = vld [vmem:[%s399 + $0x98] sm:$0xff]
    %v420 = vld [vmem:[%s399 + $0xa0] sm:$0xff]
    %v421 = vld [vmem:[%s399 + $0xa8] sm:$0xff]
    %v422 = vld [vmem:[%s399 + $0xb0] sm:$0xff]
    %v423 = vld [vmem:[%s399 + $0xb8] sm:$0xff]
    %v424 = vld [vmem:[%s399 + $0xc0] sm:$0xff]
    %v425 = vld [vmem:[%s399 + $0xc8] sm:$0xff]
    %v426 = vld [vmem:[%s399 + $0xd0] sm:$0xff]
    %v427 = vld [vmem:[%s399 + $0xd8] sm:$0xff]
    %v428 = vld [vmem:[%s399 + $0xe0] sm:$0xff]
    %v429 = vld [vmem:[%s399 + $0xe8] sm:$0xff]
    %v430 = vld [vmem:[%s399 + $0xf0] sm:$0xff]
    %v431 = vld [vmem:[%s399 + $0xf8] sm:$0xff]
    %v432 = vld [vmem:[%s399 + $0x100] sm:$0xff]
    %v433 = vld [vmem:[%s399 + $0x108] sm:$0xff]
    %v434 = vld [vmem:[%s399 + $0x110] sm:$0xff]
    %v435 = vld [vmem:[%s399 + $0x118] sm:$0xff]
    %v436 = vld [vmem:[%s399 + $0x120] sm:$0xff]
    %v437 = vld [vmem:[%s399 + $0x128] sm:$0xff]
    %v438 = vld [vmem:[%s399 + $0x130] sm:$0xff]
    %v439 = vld [vmem:[%s399 + $0x138] sm:$0xff]
    %v440 = vld [vmem:[%s399 + $0x140] sm:$0xff]
    %v441 = vld [vmem:[%s399 + $0x148] sm:$0xff]
    %v442 = vld [vmem:[%s399 + $0x150] sm:$0xff]
    %v443 = vld [vmem:[%s399 + $0x158] sm:$0xff]
    %v444 = vld [vmem:[%s399 + $0x160] sm:$0xff]
    %v445 = vld [vmem:[%s399 + $0x168] sm:$0xff]
    %v446 = vld [vmem:[%s399 + $0x170] sm:$0xff]
    %v447 = vld [vmem:[%s399 + $0x178] sm:$0xff]
    %s448 = scalar_lea.vmem %s5, 256
    %v449 = vld [vmem:[%s448] sm:$0xff]
    %v450 = vld [vmem:[%s448 + $0x8] sm:$0xff]
    %v451 = vld [vmem:[%s448 + $0x10] sm:$0xff]
    %v452 = vld [vmem:[%s448 + $0x18] sm:$0xff]
    %v453 = vld [vmem:[%s448 + $0x20] sm:$0xff]
    %v454 = vld [vmem:[%s448 + $0x28] sm:$0xff]
    %v455 = vld [vmem:[%s448 + $0x30] sm:$0xff]
    %v456 = vld [vmem:[%s448 + $0x38] sm:$0xff]
    %v457 = vld [vmem:[%s448 + $0x40] sm:$0xff]
    %v458 = vld [vmem:[%s448 + $0x48] sm:$0xff]
    %v459 = vld [vmem:[%s448 + $0x50] sm:$0xff]
    %v460 = vld [vmem:[%s448 + $0x58] sm:$0xff]
    %v461 = vld [vmem:[%s448 + $0x60] sm:$0xff]
    %v462 = vld [vmem:[%s448 + $0x68] sm:$0xff]
    %v463 = vld [vmem:[%s448 + $0x70] sm:$0xff]
    %v464 = vld [vmem:[%s448 + $0x78] sm:$0xff]
    %v465 = vld [vmem:[%s448 + $0x80] sm:$0xff]
    %v466 = vld [vmem:[%s448 + $0x88] sm:$0xff]
    %v467 = vld [vmem:[%s448 + $0x90] sm:$0xff]
    %v468 = vld [vmem:[%s448 + $0x98] sm:$0xff]
    %v469 = vld [vmem:[%s448 + $0xa0] sm:$0xff]
    %v470 = vld [vmem:[%s448 + $0xa8] sm:$0xff]
    %v471 = vld [vmem:[%s448 + $0xb0] sm:$0xff]
    %v472 = vld [vmem:[%s448 + $0xb8] sm:$0xff]
    %v473 = vld [vmem:[%s448 + $0xc0] sm:$0xff]
    %v474 = vld [vmem:[%s448 + $0xc8] sm:$0xff]
    %v475 = vld [vmem:[%s448 + $0xd0] sm:$0xff]
    %v476 = vld [vmem:[%s448 + $0xd8] sm:$0xff]
    %v477 = vld [vmem:[%s448 + $0xe0] sm:$0xff]
    %v478 = vld [vmem:[%s448 + $0xe8] sm:$0xff]
    %v479 = vld [vmem:[%s448 + $0xf0] sm:$0xff]
    %v480 = vld [vmem:[%s448 + $0xf8] sm:$0xff]
    %v481 = vmul.f32 %v397, %v397
    %v482 = vmul.f32 %v398, %v398
    %v483 = vsel %vm233, %v482, 0.0
    %v484 = vadd.f32 %v481, %v483
    %485 = vadd.xlane.f32.xlu0 %v484
    %v486 = vpop.xlane.xlu0 %485
    %v487 = vmul.f32 %v486, %v238
    %v488 = vadd.f32 %v487, 1e-05
    %v489 = vrsqrt.pop %v488
    %v490 = vmul.f32 %v397, %v489
    %v491 = vmul.f32 %v398, %v489
    %v493 = vsel %vm233, %v491, 0
    %495 = vmatprep.subr.mxu0 %v431
    %496 = vmatpush1.msra.mxu0 %v430
    %497 = vmatprep.subr.mxu0 %v429
    %498 = vmatpush1.msra.mxu0 %v428
    %499 = vmatprep.subr.mxu0 %v427
    %500 = vmatpush1.msra.mxu0 %v426
    %501 = vmatprep.subr.mxu0 %v425
    %502 = vmatpush1.msra.mxu0 %v424
    %503 = vmatprep.subr.mxu0 %v423
    %504 = vmatpush1.msra.mxu0 %v422
    %505 = vmatprep.subr.mxu0 %v421
    %506 = vmatpush1.msra.mxu0 %v420
    %507 = vmatprep.subr.mxu0 %v419
    %508 = vmatpush1.msra.mxu0 %v418
    %509 = vmatprep.subr.mxu0 %v417
    %510 = vmatpush1.msra.mxu0 %v416
    %511 = vmatprep.subr.mxu0 %v415
    %512 = vmatpush1.msra.mxu0 %v414
    %513 = vmatprep.subr.mxu0 %v413
    %514 = vmatpush1.msra.mxu0 %v412
    %515 = vmatprep.subr.mxu0 %v411
    %516 = vmatpush1.msra.mxu0 %v410
    %517 = vmatprep.subr.mxu0 %v409
    %518 = vmatpush1.msra.mxu0 %v408
    %519 = vmatprep.subr.mxu0 %v407
    %520 = vmatpush1.msra.mxu0 %v406
    %521 = vmatprep.subr.mxu0 %v405
    %522 = vmatpush1.msra.mxu0 %v404
    %523 = vmatprep.subr.mxu0 %v403
    %524 = vmatpush1.msra.mxu0 %v402
    %525 = vmatprep.subr.mxu0 %v401
    %526 = vmatpush1.msra.mxu0 %v400
    %527 = vmatprep.subr.mxu0 0.0
    %528 = vmatpush2.msra.mxu0 0.0
    %529 = vmatprep.subr.mxu0 0.0
    %530 = vmatpush2.msra.mxu0 0.0
    %531 = vmatprep.subr.mxu0 0.0
    %532 = vmatpush2.msra.mxu0 0.0
    %533 = vmatprep.subr.mxu0 0.0
    %534 = vmatpush2.msra.mxu0 0.0
    %535 = vmatprep.subr.mxu0 0.0
    %536 = vmatpush2.msra.mxu0 0.0
    %537 = vmatprep.subr.mxu0 0.0
    %538 = vmatpush2.msra.mxu0 0.0
    %539 = vmatprep.subr.mxu0 0.0
    %540 = vmatpush2.msra.mxu0 0.0
    %541 = vmatprep.subr.mxu0 0.0
    %542 = vmatpush2.msra.mxu0 0.0
    %543 = vmatprep.subr.mxu0 %v447
    %544 = vmatpush2.msra.mxu0 %v446
    %545 = vmatprep.subr.mxu0 %v445
    %546 = vmatpush2.msra.mxu0 %v444
    %547 = vmatprep.subr.mxu0 %v443
    %548 = vmatpush2.msra.mxu0 %v442
    %549 = vmatprep.subr.mxu0 %v441
    %550 = vmatpush2.msra.mxu0 %v440
    %551 = vmatprep.subr.mxu0 %v439
    %552 = vmatpush2.msra.mxu0 %v438
    %553 = vmatprep.subr.mxu0 %v437
    %554 = vmatpush2.msra.mxu0 %v436
    %555 = vmatprep.subr.mxu0 %v435
    %556 = vmatpush2.msra.mxu0 %v434
    %557 = vmatprep.subr.mxu0 %v433
    %558 = vmatpush2.msra.mxu0 %v432
    %559 = vmatprep.mubr.f32.mxu0 %v493
    %560 = vmatmul.mubr.f32.gmra.mxu0 %v490
    %v561 = vpop.f32.mrf.mxu0
    %v562 = vadd.f32 0.0, %v561
    %v563 = vpop.f32.mrf.mxu0
    %v564 = vadd.f32 0.0, %v563
    %565 = vdwg.mxu0
    %v566 = vxor.u32 %v562, 2147483648
    %v567 = vmul.f32 %v566, 1.442695
    %v568 = vpow.pop %v567
    %v569 = vadd.f32 %v568, 1.0
    %v570 = vrcp.pop %v569
    %v571 = vmul.f32 1.0, %v570
    %v572 = vmul.f32 %v562, %v571
    %v573 = vmul.f32 %v572, %v564
    %574 = vmatprep.subr.mxu0 %v480
    %575 = vmatpush1.msra.mxu0 %v479
    %576 = vmatprep.subr.mxu0 %v478
    %577 = vmatpush1.msra.mxu0 %v477
    %578 = vmatprep.subr.mxu0 %v476
    %579 = vmatpush1.msra.mxu0 %v475
    %580 = vmatprep.subr.mxu0 %v474
    %581 = vmatpush1.msra.mxu0 %v473
    %582 = vmatprep.subr.mxu0 %v472
    %583 = vmatpush1.msra.mxu0 %v471
    %584 = vmatprep.subr.mxu0 %v470
    %585 = vmatpush1.msra.mxu0 %v469
    %586 = vmatprep.subr.mxu0 %v468
    %587 = vmatpush1.msra.mxu0 %v467
    %588 = vmatprep.subr.mxu0 %v466
    %589 = vmatpush1.msra.mxu0 %v465
    %590 = vmatprep.subr.mxu0 %v464
    %591 = vmatpush1.msra.mxu0 %v463
    %592 = vmatprep.subr.mxu0 %v462
    %593 = vmatpush1.msra.mxu0 %v461
    %594 = vmatprep.subr.mxu0 %v460
    %595 = vmatpush1.msra.mxu0 %v459
    %596 = vmatprep.subr.mxu0 %v458
    %597 = vmatpush1.msra.mxu0 %v457
    %598 = vmatprep.subr.mxu0 %v456
    %599 = vmatpush1.msra.mxu0 %v455
    %600 = vmatprep.subr.mxu0 %v454
    %601 = vmatpush1.msra.mxu0 %v453
    %602 = vmatprep.subr.mxu0 %v452
    %603 = vmatpush1.msra.mxu0 %v451
    %604 = vmatprep.subr.mxu0 %v450
    %605 = vmatpush1.msra.mxu0 %v449
    %606 = vmatprep.subr.mxu0 0.0
    %607 = vmatpush2.msra.mxu0 0.0
    %608 = vmatprep.subr.mxu0 0.0
    %609 = vmatpush2.msra.mxu0 0.0
    %610 = vmatprep.subr.mxu0 0.0
    %611 = vmatpush2.msra.mxu0 0.0
    %612 = vmatprep.subr.mxu0 0.0
    %613 = vmatpush2.msra.mxu0 0.0
    %614 = vmatprep.subr.mxu0 0.0
    %615 = vmatpush2.msra.mxu0 0.0
    %616 = vmatprep.subr.mxu0 0.0
    %617 = vmatpush2.msra.mxu0 0.0
    %618 = vmatprep.subr.mxu0 0.0
    %619 = vmatpush2.msra.mxu0 0.0
    %620 = vmatprep.subr.mxu0 0.0
    %621 = vmatpush2.msra.mxu0 0.0
    %622 = vmatprep.subr.mxu0 0.0
    %623 = vmatpush2.msra.mxu0 0.0
    %624 = vmatprep.subr.mxu0 0.0
    %625 = vmatpush2.msra.mxu0 0.0
    %626 = vmatprep.subr.mxu0 0.0
    %627 = vmatpush2.msra.mxu0 0.0
    %628 = vmatprep.subr.mxu0 0.0
    %629 = vmatpush2.msra.mxu0 0.0
    %630 = vmatprep.subr.mxu0 0.0
    %631 = vmatpush2.msra.mxu0 0.0
    %632 = vmatprep.subr.mxu0 0.0
    %633 = vmatpush2.msra.mxu0 0.0
    %634 = vmatprep.subr.mxu0 0.0
    %635 = vmatpush2.msra.mxu0 0.0
    %636 = vmatprep.subr.mxu0 0.0
    %637 = vmatpush2.msra.mxu0 0.0
    %638 = vmatprep.mubr.f32.mxu0 0.0
    %639 = vmatmul.mubr.f32.gmra.mxu0 %v573
    %v640 = vpop.f32.mrf.mxu0
    %v641 = vadd.f32 0.0, %v640
    %v642 = vpop.f32.mrf.mxu0
    %v643 = vadd.f32 0.0, %v642
    %644 = vdwg.mxu0
    %v645 = vadd.f32 %v397, %v641
    %v646 = vadd.f32 %v398, %v643
    %s647 = scalar_lea.vmem %s4, 768
    %v648 = vld [vmem:[%s647] sm:$0xff]
    %v649 = vld [vmem:[%s647 + $0x8] sm:$0xff]
    %v650 = vld [vmem:[%s647 + $0x10] sm:$0xff]
    %v651 = vld [vmem:[%s647 + $0x18] sm:$0xff]
    %v652 = vld [vmem:[%s647 + $0x20] sm:$0xff]
    %v653 = vld [vmem:[%s647 + $0x28] sm:$0xff]
    %v654 = vld [vmem:[%s647 + $0x30] sm:$0xff]
    %v655 = vld [vmem:[%s647 + $0x38] sm:$0xff]
    %v656 = vld [vmem:[%s647 + $0x40] sm:$0xff]
    %v657 = vld [vmem:[%s647 + $0x48] sm:$0xff]
    %v658 = vld [vmem:[%s647 + $0x50] sm:$0xff]
    %v659 = vld [vmem:[%s647 + $0x58] sm:$0xff]
    %v660 = vld [vmem:[%s647 + $0x60] sm:$0xff]
    %v661 = vld [vmem:[%s647 + $0x68] sm:$0xff]
    %v662 = vld [vmem:[%s647 + $0x70] sm:$0xff]
    %v663 = vld [vmem:[%s647 + $0x78] sm:$0xff]
    %v664 = vld [vmem:[%s647 + $0x80] sm:$0xff]
    %v665 = vld [vmem:[%s647 + $0x88] sm:$0xff]
    %v666 = vld [vmem:[%s647 + $0x90] sm:$0xff]
    %v667 = vld [vmem:[%s647 + $0x98] sm:$0xff]
    %v668 = vld [vmem:[%s647 + $0xa0] sm:$0xff]
    %v669 = vld [vmem:[%s647 + $0xa8] sm:$0xff]
    %v670 = vld [vmem:[%s647 + $0xb0] sm:$0xff]
    %v671 = vld [vmem:[%s647 + $0xb8] sm:$0xff]
    %v672 = vld [vmem:[%s647 + $0xc0] sm:$0xff]
    %v673 = vld [vmem:[%s647 + $0xc8] sm:$0xff]
    %v674 = vld [vmem:[%s647 + $0xd0] sm:$0xff]
    %v675 = vld [vmem:[%s647 + $0xd8] sm:$0xff]
    %v676 = vld [vmem:[%s647 + $0xe0] sm:$0xff]
    %v677 = vld [vmem:[%s647 + $0xe8] sm:$0xff]
    %v678 = vld [vmem:[%s647 + $0xf0] sm:$0xff]
    %v679 = vld [vmem:[%s647 + $0xf8] sm:$0xff]
    %v680 = vld [vmem:[%s647 + $0x100] sm:$0xff]
    %v681 = vld [vmem:[%s647 + $0x108] sm:$0xff]
    %v682 = vld [vmem:[%s647 + $0x110] sm:$0xff]
    %v683 = vld [vmem:[%s647 + $0x118] sm:$0xff]
    %v684 = vld [vmem:[%s647 + $0x120] sm:$0xff]
    %v685 = vld [vmem:[%s647 + $0x128] sm:$0xff]
    %v686 = vld [vmem:[%s647 + $0x130] sm:$0xff]
    %v687 = vld [vmem:[%s647 + $0x138] sm:$0xff]
    %v688 = vld [vmem:[%s647 + $0x140] sm:$0xff]
    %v689 = vld [vmem:[%s647 + $0x148] sm:$0xff]
    %v690 = vld [vmem:[%s647 + $0x150] sm:$0xff]
    %v691 = vld [vmem:[%s647 + $0x158] sm:$0xff]
    %v692 = vld [vmem:[%s647 + $0x160] sm:$0xff]
    %v693 = vld [vmem:[%s647 + $0x168] sm:$0xff]
    %v694 = vld [vmem:[%s647 + $0x170] sm:$0xff]
    %v695 = vld [vmem:[%s647 + $0x178] sm:$0xff]
    %s696 = scalar_lea.vmem %s5, 512
    %v697 = vld [vmem:[%s696] sm:$0xff]
    %v698 = vld [vmem:[%s696 + $0x8] sm:$0xff]
    %v699 = vld [vmem:[%s696 + $0x10] sm:$0xff]
    %v700 = vld [vmem:[%s696 + $0x18] sm:$0xff]
    %v701 = vld [vmem:[%s696 + $0x20] sm:$0xff]
    %v702 = vld [vmem:[%s696 + $0x28] sm:$0xff]
    %v703 = vld [vmem:[%s696 + $0x30] sm:$0xff]
    %v704 = vld [vmem:[%s696 + $0x38] sm:$0xff]
    %v705 = vld [vmem:[%s696 + $0x40] sm:$0xff]
    %v706 = vld [vmem:[%s696 + $0x48] sm:$0xff]
    %v707 = vld [vmem:[%s696 + $0x50] sm:$0xff]
    %v708 = vld [vmem:[%s696 + $0x58] sm:$0xff]
    %v709 = vld [vmem:[%s696 + $0x60] sm:$0xff]
    %v710 = vld [vmem:[%s696 + $0x68] sm:$0xff]
    %v711 = vld [vmem:[%s696 + $0x70] sm:$0xff]
    %v712 = vld [vmem:[%s696 + $0x78] sm:$0xff]
    %v713 = vld [vmem:[%s696 + $0x80] sm:$0xff]
    %v714 = vld [vmem:[%s696 + $0x88] sm:$0xff]
    %v715 = vld [vmem:[%s696 + $0x90] sm:$0xff]
    %v716 = vld [vmem:[%s696 + $0x98] sm:$0xff]
    %v717 = vld [vmem:[%s696 + $0xa0] sm:$0xff]
    %v718 = vld [vmem:[%s696 + $0xa8] sm:$0xff]
    %v719 = vld [vmem:[%s696 + $0xb0] sm:$0xff]
    %v720 = vld [vmem:[%s696 + $0xb8] sm:$0xff]
    %v721 = vld [vmem:[%s696 + $0xc0] sm:$0xff]
    %v722 = vld [vmem:[%s696 + $0xc8] sm:$0xff]
    %v723 = vld [vmem:[%s696 + $0xd0] sm:$0xff]
    %v724 = vld [vmem:[%s696 + $0xd8] sm:$0xff]
    %v725 = vld [vmem:[%s696 + $0xe0] sm:$0xff]
    %v726 = vld [vmem:[%s696 + $0xe8] sm:$0xff]
    %v727 = vld [vmem:[%s696 + $0xf0] sm:$0xff]
    %v728 = vld [vmem:[%s696 + $0xf8] sm:$0xff]
    %v729 = vmul.f32 %v645, %v645
    %v730 = vmul.f32 %v646, %v646
    %v731 = vsel %vm233, %v730, 0.0
    %v732 = vadd.f32 %v729, %v731
    %733 = vadd.xlane.f32.xlu0 %v732
    %v734 = vpop.xlane.xlu0 %733
    %v735 = vmul.f32 %v734, %v238
    %v736 = vadd.f32 %v735, 1e-05
    %v737 = vrsqrt.pop %v736
    %v738 = vmul.f32 %v645, %v737
    %v739 = vmul.f32 %v646, %v737
    %v741 = vsel %vm233, %v739, 0
    %743 = vmatprep.subr.mxu0 %v679
    %744 = vmatpush1.msra.mxu0 %v678
    %745 = vmatprep.subr.mxu0 %v677
    %746 = vmatpush1.msra.mxu0 %v676
    %747 = vmatprep.subr.mxu0 %v675
    %748 = vmatpush1.msra.mxu0 %v674
    %749 = vmatprep.subr.mxu0 %v673
    %750 = vmatpush1.msra.mxu0 %v672
    %751 = vmatprep.subr.mxu0 %v671
    %752 = vmatpush1.msra.mxu0 %v670
    %753 = vmatprep.subr.mxu0 %v669
    %754 = vmatpush1.msra.mxu0 %v668
    %755 = vmatprep.subr.mxu0 %v667
    %756 = vmatpush1.msra.mxu0 %v666
    %757 = vmatprep.subr.mxu0 %v665
    %758 = vmatpush1.msra.mxu0 %v664
    %759 = vmatprep.subr.mxu0 %v663
    %760 = vmatpush1.msra.mxu0 %v662
    %761 = vmatprep.subr.mxu0 %v661
    %762 = vmatpush1.msra.mxu0 %v660
    %763 = vmatprep.subr.mxu0 %v659
    %764 = vmatpush1.msra.mxu0 %v658
    %765 = vmatprep.subr.mxu0 %v657
    %766 = vmatpush1.msra.mxu0 %v656
    %767 = vmatprep.subr.mxu0 %v655
    %768 = vmatpush1.msra.mxu0 %v654
    %769 = vmatprep.subr.mxu0 %v653
    %770 = vmatpush1.msra.mxu0 %v652
    %771 = vmatprep.subr.mxu0 %v651
    %772 = vmatpush1.msra.mxu0 %v650
    %773 = vmatprep.subr.mxu0 %v649
    %774 = vmatpush1.msra.mxu0 %v648
    %775 = vmatprep.subr.mxu0 0.0
    %776 = vmatpush2.msra.mxu0 0.0
    %777 = vmatprep.subr.mxu0 0.0
    %778 = vmatpush2.msra.mxu0 0.0
    %779 = vmatprep.subr.mxu0 0.0
    %780 = vmatpush2.msra.mxu0 0.0
    %781 = vmatprep.subr.mxu0 0.0
    %782 = vmatpush2.msra.mxu0 0.0
    %783 = vmatprep.subr.mxu0 0.0
    %784 = vmatpush2.msra.mxu0 0.0
    %785 = vmatprep.subr.mxu0 0.0
    %786 = vmatpush2.msra.mxu0 0.0
    %787 = vmatprep.subr.mxu0 0.0
    %788 = vmatpush2.msra.mxu0 0.0
    %789 = vmatprep.subr.mxu0 0.0
    %790 = vmatpush2.msra.mxu0 0.0
    %791 = vmatprep.subr.mxu0 %v695
    %792 = vmatpush2.msra.mxu0 %v694
    %793 = vmatprep.subr.mxu0 %v693
    %794 = vmatpush2.msra.mxu0 %v692
    %795 = vmatprep.subr.mxu0 %v691
    %796 = vmatpush2.msra.mxu0 %v690
    %797 = vmatprep.subr.mxu0 %v689
    %798 = vmatpush2.msra.mxu0 %v688
    %799 = vmatprep.subr.mxu0 %v687
    %800 = vmatpush2.msra.mxu0 %v686
    %801 = vmatprep.subr.mxu0 %v685
    %802 = vmatpush2.msra.mxu0 %v684
    %803 = vmatprep.subr.mxu0 %v683
    %804 = vmatpush2.msra.mxu0 %v682
    %805 = vmatprep.subr.mxu0 %v681
    %806 = vmatpush2.msra.mxu0 %v680
    %807 = vmatprep.mubr.f32.mxu0 %v741
    %808 = vmatmul.mubr.f32.gmra.mxu0 %v738
    %v809 = vpop.f32.mrf.mxu0
    %v810 = vadd.f32 0.0, %v809
    %v811 = vpop.f32.mrf.mxu0
    %v812 = vadd.f32 0.0, %v811
    %813 = vdwg.mxu0
    %v814 = vxor.u32 %v810, 2147483648
    %v815 = vmul.f32 %v814, 1.442695
    %v816 = vpow.pop %v815
    %v817 = vadd.f32 %v816, 1.0
    %v818 = vrcp.pop %v817
    %v819 = vmul.f32 1.0, %v818
    %v820 = vmul.f32 %v810, %v819
    %v821 = vmul.f32 %v820, %v812
    %822 = vmatprep.subr.mxu0 %v728
    %823 = vmatpush1.msra.mxu0 %v727
    %824 = vmatprep.subr.mxu0 %v726
    %825 = vmatpush1.msra.mxu0 %v725
    %826 = vmatprep.subr.mxu0 %v724
    %827 = vmatpush1.msra.mxu0 %v723
    %828 = vmatprep.subr.mxu0 %v722
    %829 = vmatpush1.msra.mxu0 %v721
    %830 = vmatprep.subr.mxu0 %v720
    %831 = vmatpush1.msra.mxu0 %v719
    %832 = vmatprep.subr.mxu0 %v718
    %833 = vmatpush1.msra.mxu0 %v717
    %834 = vmatprep.subr.mxu0 %v716
    %835 = vmatpush1.msra.mxu0 %v715
    %836 = vmatprep.subr.mxu0 %v714
    %837 = vmatpush1.msra.mxu0 %v713
    %838 = vmatprep.subr.mxu0 %v712
    %839 = vmatpush1.msra.mxu0 %v711
    %840 = vmatprep.subr.mxu0 %v710
    %841 = vmatpush1.msra.mxu0 %v709
    %842 = vmatprep.subr.mxu0 %v708
    %843 = vmatpush1.msra.mxu0 %v707
    %844 = vmatprep.subr.mxu0 %v706
    %845 = vmatpush1.msra.mxu0 %v705
    %846 = vmatprep.subr.mxu0 %v704
    %847 = vmatpush1.msra.mxu0 %v703
    %848 = vmatprep.subr.mxu0 %v702
    %849 = vmatpush1.msra.mxu0 %v701
    %850 = vmatprep.subr.mxu0 %v700
    %851 = vmatpush1.msra.mxu0 %v699
    %852 = vmatprep.subr.mxu0 %v698
    %853 = vmatpush1.msra.mxu0 %v697
    %854 = vmatprep.subr.mxu0 0.0
    %855 = vmatpush2.msra.mxu0 0.0
    %856 = vmatprep.subr.mxu0 0.0
    %857 = vmatpush2.msra.mxu0 0.0
    %858 = vmatprep.subr.mxu0 0.0
    %859 = vmatpush2.msra.mxu0 0.0
    %860 = vmatprep.subr.mxu0 0.0
    %861 = vmatpush2.msra.mxu0 0.0
    %862 = vmatprep.subr.mxu0 0.0
    %863 = vmatpush2.msra.mxu0 0.0
    %864 = vmatprep.subr.mxu0 0.0
    %865 = vmatpush2.msra.mxu0 0.0
    %866 = vmatprep.subr.mxu0 0.0
    %867 = vmatpush2.msra.mxu0 0.0
    %868 = vmatprep.subr.mxu0 0.0
    %869 = vmatpush2.msra.mxu0 0.0
    %870 = vmatprep.subr.mxu0 0.0
    %871 = vmatpush2.msra.mxu0 0.0
    %872 = vmatprep.subr.mxu0 0.0
    %873 = vmatpush2.msra.mxu0 0.0
    %874 = vmatprep.subr.mxu0 0.0
    %875 = vmatpush2.msra.mxu0 0.0
    %876 = vmatprep.subr.mxu0 0.0
    %877 = vmatpush2.msra.mxu0 0.0
    %878 = vmatprep.subr.mxu0 0.0
    %879 = vmatpush2.msra.mxu0 0.0
    %880 = vmatprep.subr.mxu0 0.0
    %881 = vmatpush2.msra.mxu0 0.0
    %882 = vmatprep.subr.mxu0 0.0
    %883 = vmatpush2.msra.mxu0 0.0
    %884 = vmatprep.subr.mxu0 0.0
    %885 = vmatpush2.msra.mxu0 0.0
    %886 = vmatprep.mubr.f32.mxu0 0.0
    %887 = vmatmul.mubr.f32.gmra.mxu0 %v821
    %v888 = vpop.f32.mrf.mxu0
    %v889 = vadd.f32 0.0, %v888
    %v890 = vpop.f32.mrf.mxu0
    %v891 = vadd.f32 0.0, %v890
    %892 = vdwg.mxu0
    %v893 = vadd.f32 %v645, %v889
    %v894 = vadd.f32 %v646, %v891
    %s895 = scalar_lea.vmem %s4, 1152
    %v896 = vld [vmem:[%s895] sm:$0xff]
    %v897 = vld [vmem:[%s895 + $0x8] sm:$0xff]
    %v898 = vld [vmem:[%s895 + $0x10] sm:$0xff]
    %v899 = vld [vmem:[%s895 + $0x18] sm:$0xff]
    %v900 = vld [vmem:[%s895 + $0x20] sm:$0xff]
    %v901 = vld [vmem:[%s895 + $0x28] sm:$0xff]
    %v902 = vld [vmem:[%s895 + $0x30] sm:$0xff]
    %v903 = vld [vmem:[%s895 + $0x38] sm:$0xff]
    %v904 = vld [vmem:[%s895 + $0x40] sm:$0xff]
    %v905 = vld [vmem:[%s895 + $0x48] sm:$0xff]
    %v906 = vld [vmem:[%s895 + $0x50] sm:$0xff]
    %v907 = vld [vmem:[%s895 + $0x58] sm:$0xff]
    %v908 = vld [vmem:[%s895 + $0x60] sm:$0xff]
    %v909 = vld [vmem:[%s895 + $0x68] sm:$0xff]
    %v910 = vld [vmem:[%s895 + $0x70] sm:$0xff]
    %v911 = vld [vmem:[%s895 + $0x78] sm:$0xff]
    %v912 = vld [vmem:[%s895 + $0x80] sm:$0xff]
    %v913 = vld [vmem:[%s895 + $0x88] sm:$0xff]
    %v914 = vld [vmem:[%s895 + $0x90] sm:$0xff]
    %v915 = vld [vmem:[%s895 + $0x98] sm:$0xff]
    %v916 = vld [vmem:[%s895 + $0xa0] sm:$0xff]
    %v917 = vld [vmem:[%s895 + $0xa8] sm:$0xff]
    %v918 = vld [vmem:[%s895 + $0xb0] sm:$0xff]
    %v919 = vld [vmem:[%s895 + $0xb8] sm:$0xff]
    %v920 = vld [vmem:[%s895 + $0xc0] sm:$0xff]
    %v921 = vld [vmem:[%s895 + $0xc8] sm:$0xff]
    %v922 = vld [vmem:[%s895 + $0xd0] sm:$0xff]
    %v923 = vld [vmem:[%s895 + $0xd8] sm:$0xff]
    %v924 = vld [vmem:[%s895 + $0xe0] sm:$0xff]
    %v925 = vld [vmem:[%s895 + $0xe8] sm:$0xff]
    %v926 = vld [vmem:[%s895 + $0xf0] sm:$0xff]
    %v927 = vld [vmem:[%s895 + $0xf8] sm:$0xff]
    %v928 = vld [vmem:[%s895 + $0x100] sm:$0xff]
    %v929 = vld [vmem:[%s895 + $0x108] sm:$0xff]
    %v930 = vld [vmem:[%s895 + $0x110] sm:$0xff]
    %v931 = vld [vmem:[%s895 + $0x118] sm:$0xff]
    %v932 = vld [vmem:[%s895 + $0x120] sm:$0xff]
    %v933 = vld [vmem:[%s895 + $0x128] sm:$0xff]
    %v934 = vld [vmem:[%s895 + $0x130] sm:$0xff]
    %v935 = vld [vmem:[%s895 + $0x138] sm:$0xff]
    %v936 = vld [vmem:[%s895 + $0x140] sm:$0xff]
    %v937 = vld [vmem:[%s895 + $0x148] sm:$0xff]
    %v938 = vld [vmem:[%s895 + $0x150] sm:$0xff]
    %v939 = vld [vmem:[%s895 + $0x158] sm:$0xff]
    %v940 = vld [vmem:[%s895 + $0x160] sm:$0xff]
    %v941 = vld [vmem:[%s895 + $0x168] sm:$0xff]
    %v942 = vld [vmem:[%s895 + $0x170] sm:$0xff]
    %v943 = vld [vmem:[%s895 + $0x178] sm:$0xff]
    %s944 = scalar_lea.vmem %s5, 768
    %v945 = vld [vmem:[%s944] sm:$0xff]
    %v946 = vld [vmem:[%s944 + $0x8] sm:$0xff]
    %v947 = vld [vmem:[%s944 + $0x10] sm:$0xff]
    %v948 = vld [vmem:[%s944 + $0x18] sm:$0xff]
    %v949 = vld [vmem:[%s944 + $0x20] sm:$0xff]
    %v950 = vld [vmem:[%s944 + $0x28] sm:$0xff]
    %v951 = vld [vmem:[%s944 + $0x30] sm:$0xff]
    %v952 = vld [vmem:[%s944 + $0x38] sm:$0xff]
    %v953 = vld [vmem:[%s944 + $0x40] sm:$0xff]
    %v954 = vld [vmem:[%s944 + $0x48] sm:$0xff]
    %v955 = vld [vmem:[%s944 + $0x50] sm:$0xff]
    %v956 = vld [vmem:[%s944 + $0x58] sm:$0xff]
    %v957 = vld [vmem:[%s944 + $0x60] sm:$0xff]
    %v958 = vld [vmem:[%s944 + $0x68] sm:$0xff]
    %v959 = vld [vmem:[%s944 + $0x70] sm:$0xff]
    %v960 = vld [vmem:[%s944 + $0x78] sm:$0xff]
    %v961 = vld [vmem:[%s944 + $0x80] sm:$0xff]
    %v962 = vld [vmem:[%s944 + $0x88] sm:$0xff]
    %v963 = vld [vmem:[%s944 + $0x90] sm:$0xff]
    %v964 = vld [vmem:[%s944 + $0x98] sm:$0xff]
    %v965 = vld [vmem:[%s944 + $0xa0] sm:$0xff]
    %v966 = vld [vmem:[%s944 + $0xa8] sm:$0xff]
    %v967 = vld [vmem:[%s944 + $0xb0] sm:$0xff]
    %v968 = vld [vmem:[%s944 + $0xb8] sm:$0xff]
    %v969 = vld [vmem:[%s944 + $0xc0] sm:$0xff]
    %v970 = vld [vmem:[%s944 + $0xc8] sm:$0xff]
    %v971 = vld [vmem:[%s944 + $0xd0] sm:$0xff]
    %v972 = vld [vmem:[%s944 + $0xd8] sm:$0xff]
    %v973 = vld [vmem:[%s944 + $0xe0] sm:$0xff]
    %v974 = vld [vmem:[%s944 + $0xe8] sm:$0xff]
    %v975 = vld [vmem:[%s944 + $0xf0] sm:$0xff]
    %v976 = vld [vmem:[%s944 + $0xf8] sm:$0xff]
    %v977 = vmul.f32 %v893, %v893
    %v978 = vmul.f32 %v894, %v894
    %v979 = vsel %vm233, %v978, 0.0
    %v980 = vadd.f32 %v977, %v979
    %981 = vadd.xlane.f32.xlu0 %v980
    %v982 = vpop.xlane.xlu0 %981
    %v983 = vmul.f32 %v982, %v238
    %v984 = vadd.f32 %v983, 1e-05
    %v985 = vrsqrt.pop %v984
    %v986 = vmul.f32 %v893, %v985
    %v987 = vmul.f32 %v894, %v985
    %v989 = vsel %vm233, %v987, 0
    %991 = vmatprep.subr.mxu0 %v927
    %992 = vmatpush1.msra.mxu0 %v926
    %993 = vmatprep.subr.mxu0 %v925
    %994 = vmatpush1.msra.mxu0 %v924
    %995 = vmatprep.subr.mxu0 %v923
    %996 = vmatpush1.msra.mxu0 %v922
    %997 = vmatprep.subr.mxu0 %v921
    %998 = vmatpush1.msra.mxu0 %v920
    %999 = vmatprep.subr.mxu0 %v919
    %1000 = vmatpush1.msra.mxu0 %v918
    %1001 = vmatprep.subr.mxu0 %v917
    %1002 = vmatpush1.msra.mxu0 %v916
    %1003 = vmatprep.subr.mxu0 %v915
    %1004 = vmatpush1.msra.mxu0 %v914
    %1005 = vmatprep.subr.mxu0 %v913
    %1006 = vmatpush1.msra.mxu0 %v912
    %1007 = vmatprep.subr.mxu0 %v911
    %1008 = vmatpush1.msra.mxu0 %v910
    %1009 = vmatprep.subr.mxu0 %v909
    %1010 = vmatpush1.msra.mxu0 %v908
    %1011 = vmatprep.subr.mxu0 %v907
    %1012 = vmatpush1.msra.mxu0 %v906
    %1013 = vmatprep.subr.mxu0 %v905
    %1014 = vmatpush1.msra.mxu0 %v904
    %1015 = vmatprep.subr.mxu0 %v903
    %1016 = vmatpush1.msra.mxu0 %v902
    %1017 = vmatprep.subr.mxu0 %v901
    %1018 = vmatpush1.msra.mxu0 %v900
    %1019 = vmatprep.subr.mxu0 %v899
    %1020 = vmatpush1.msra.mxu0 %v898
    %1021 = vmatprep.subr.mxu0 %v897
    %1022 = vmatpush1.msra.mxu0 %v896
    %1023 = vmatprep.subr.mxu0 0.0
    %1024 = vmatpush2.msra.mxu0 0.0
    %1025 = vmatprep.subr.mxu0 0.0
    %1026 = vmatpush2.msra.mxu0 0.0
    %1027 = vmatprep.subr.mxu0 0.0
    %1028 = vmatpush2.msra.mxu0 0.0
    %1029 = vmatprep.subr.mxu0 0.0
    %1030 = vmatpush2.msra.mxu0 0.0
    %1031 = vmatprep.subr.mxu0 0.0
    %1032 = vmatpush2.msra.mxu0 0.0
    %1033 = vmatprep.subr.mxu0 0.0
    %1034 = vmatpush2.msra.mxu0 0.0
    %1035 = vmatprep.subr.mxu0 0.0
    %1036 = vmatpush2.msra.mxu0 0.0
    %1037 = vmatprep.subr.mxu0 0.0
    %1038 = vmatpush2.msra.mxu0 0.0
    %1039 = vmatprep.subr.mxu0 %v943
    %1040 = vmatpush2.msra.mxu0 %v942
    %1041 = vmatprep.subr.mxu0 %v941
    %1042 = vmatpush2.msra.mxu0 %v940
    %1043 = vmatprep.subr.mxu0 %v939
    %1044 = vmatpush2.msra.mxu0 %v938
    %1045 = vmatprep.subr.mxu0 %v937
    %1046 = vmatpush2.msra.mxu0 %v936
    %1047 = vmatprep.subr.mxu0 %v935
    %1048 = vmatpush2.msra.mxu0 %v934
    %1049 = vmatprep.subr.mxu0 %v933
    %1050 = vmatpush2.msra.mxu0 %v932
    %1051 = vmatprep.subr.mxu0 %v931
    %1052 = vmatpush2.msra.mxu0 %v930
    %1053 = vmatprep.subr.mxu0 %v929
    %1054 = vmatpush2.msra.mxu0 %v928
    %1055 = vmatprep.mubr.f32.mxu0 %v989
    %1056 = vmatmul.mubr.f32.gmra.mxu0 %v986
    %v1057 = vpop.f32.mrf.mxu0
    %v1058 = vadd.f32 0.0, %v1057
    %v1059 = vpop.f32.mrf.mxu0
    %v1060 = vadd.f32 0.0, %v1059
    %1061 = vdwg.mxu0
    %v1062 = vxor.u32 %v1058, 2147483648
    %v1063 = vmul.f32 %v1062, 1.442695
    %v1064 = vpow.pop %v1063
    %v1065 = vadd.f32 %v1064, 1.0
    %v1066 = vrcp.pop %v1065
    %v1067 = vmul.f32 1.0, %v1066
    %v1068 = vmul.f32 %v1058, %v1067
    %v1069 = vmul.f32 %v1068, %v1060
    %1070 = vmatprep.subr.mxu0 %v976
    %1071 = vmatpush1.msra.mxu0 %v975
    %1072 = vmatprep.subr.mxu0 %v974
    %1073 = vmatpush1.msra.mxu0 %v973
    %1074 = vmatprep.subr.mxu0 %v972
    %1075 = vmatpush1.msra.mxu0 %v971
    %1076 = vmatprep.subr.mxu0 %v970
    %1077 = vmatpush1.msra.mxu0 %v969
    %1078 = vmatprep.subr.mxu0 %v968
    %1079 = vmatpush1.msra.mxu0 %v967
    %1080 = vmatprep.subr.mxu0 %v966
    %1081 = vmatpush1.msra.mxu0 %v965
    %1082 = vmatprep.subr.mxu0 %v964
    %1083 = vmatpush1.msra.mxu0 %v963
    %1084 = vmatprep.subr.mxu0 %v962
    %1085 = vmatpush1.msra.mxu0 %v961
    %1086 = vmatprep.subr.mxu0 %v960
    %1087 = vmatpush1.msra.mxu0 %v959
    %1088 = vmatprep.subr.mxu0 %v958
    %1089 = vmatpush1.msra.mxu0 %v957
    %1090 = vmatprep.subr.mxu0 %v956
    %1091 = vmatpush1.msra.mxu0 %v955
    %1092 = vmatprep.subr.mxu0 %v954
    %1093 = vmatpush1.msra.mxu0 %v953
    %1094 = vmatprep.subr.mxu0 %v952
    %1095 = vmatpush1.msra.mxu0 %v951
    %1096 = vmatprep.subr.mxu0 %v950
    %1097 = vmatpush1.msra.mxu0 %v949
    %1098 = vmatprep.subr.mxu0 %v948
    %1099 = vmatpush1.msra.mxu0 %v947
    %1100 = vmatprep.subr.mxu0 %v946
    %1101 = vmatpush1.msra.mxu0 %v945
    %1102 = vmatprep.subr.mxu0 0.0
    %1103 = vmatpush2.msra.mxu0 0.0
    %1104 = vmatprep.subr.mxu0 0.0
    %1105 = vmatpush2.msra.mxu0 0.0
    %1106 = vmatprep.subr.mxu0 0.0
    %1107 = vmatpush2.msra.mxu0 0.0
    %1108 = vmatprep.subr.mxu0 0.0
    %1109 = vmatpush2.msra.mxu0 0.0
    %1110 = vmatprep.subr.mxu0 0.0
    %1111 = vmatpush2.msra.mxu0 0.0
    %1112 = vmatprep.subr.mxu0 0.0
    %1113 = vmatpush2.msra.mxu0 0.0
    %1114 = vmatprep.subr.mxu0 0.0
    %1115 = vmatpush2.msra.mxu0 0.0
    %1116 = vmatprep.subr.mxu0 0.0
    %1117 = vmatpush2.msra.mxu0 0.0
    %1118 = vmatprep.subr.mxu0 0.0
    %1119 = vmatpush2.msra.mxu0 0.0
    %1120 = vmatprep.subr.mxu0 0.0
    %1121 = vmatpush2.msra.mxu0 0.0
    %1122 = vmatprep.subr.mxu0 0.0
    %1123 = vmatpush2.msra.mxu0 0.0
    %1124 = vmatprep.subr.mxu0 0.0
    %1125 = vmatpush2.msra.mxu0 0.0
    %1126 = vmatprep.subr.mxu0 0.0
    %1127 = vmatpush2.msra.mxu0 0.0
    %1128 = vmatprep.subr.mxu0 0.0
    %1129 = vmatpush2.msra.mxu0 0.0
    %1130 = vmatprep.subr.mxu0 0.0
    %1131 = vmatpush2.msra.mxu0 0.0
    %1132 = vmatprep.subr.mxu0 0.0
    %1133 = vmatpush2.msra.mxu0 0.0
    %1134 = vmatprep.mubr.f32.mxu0 0.0
    %1135 = vmatmul.mubr.f32.gmra.mxu0 %v1069
    %v1136 = vpop.f32.mrf.mxu0
    %v1137 = vadd.f32 0.0, %v1136
    %v1138 = vpop.f32.mrf.mxu0
    %v1139 = vadd.f32 0.0, %v1138
    %1140 = vdwg.mxu0
    %v1141 = vadd.f32 %v893, %v1137
    %v1142 = vadd.f32 %v894, %v1139
    %v1143 = vld [vmem:[%s6] sm:$0xff]
    %v1144 = vld [vmem:[%s6 + $0x8] sm:$0xff]
    %v1145 = vld [vmem:[%s6 + $0x10] sm:$0xff]
    %v1146 = vld [vmem:[%s6 + $0x18] sm:$0xff]
    %v1147 = vld [vmem:[%s6 + $0x20] sm:$0xff]
    %v1148 = vld [vmem:[%s6 + $0x28] sm:$0xff]
    %v1149 = vld [vmem:[%s6 + $0x30] sm:$0xff]
    %v1150 = vld [vmem:[%s6 + $0x38] sm:$0xff]
    %v1151 = vld [vmem:[%s6 + $0x40] sm:$0xff]
    %v1152 = vld [vmem:[%s6 + $0x48] sm:$0xff]
    %v1153 = vld [vmem:[%s6 + $0x50] sm:$0xff]
    %v1154 = vld [vmem:[%s6 + $0x58] sm:$0xff]
    %v1155 = vld [vmem:[%s6 + $0x60] sm:$0xff]
    %v1156 = vld [vmem:[%s6 + $0x68] sm:$0xff]
    %v1157 = vld [vmem:[%s6 + $0x70] sm:$0xff]
    %v1158 = vld [vmem:[%s6 + $0x78] sm:$0xff]
    %v1159 = vld [vmem:[%s6 + $0x80] sm:$0xff]
    %v1160 = vld [vmem:[%s6 + $0x88] sm:$0xff]
    %v1161 = vld [vmem:[%s6 + $0x90] sm:$0xff]
    %v1162 = vld [vmem:[%s6 + $0x98] sm:$0xff]
    %v1163 = vld [vmem:[%s6 + $0xa0] sm:$0xff]
    %v1164 = vld [vmem:[%s6 + $0xa8] sm:$0xff]
    %v1165 = vld [vmem:[%s6 + $0xb0] sm:$0xff]
    %v1166 = vld [vmem:[%s6 + $0xb8] sm:$0xff]
    %v1167 = vld [vmem:[%s7] sm:$0x1]
    %v1169 = vlaneseq
    %v1170 = vshrl.u32 %v1169, 7
    %v1171 = vsub.s32 0, %v1170
    %v1172 = vrot.slane %v1167, %v1171
    %v1175 = vsel %vm233, %v1142, 0
    %1177 = vmatprep.subr.mxu0 0.0
    %1178 = vmatpush1.msra.mxu0 %v1158
    %1179 = vmatprep.subr.mxu0 0.0
    %1180 = vmatpush1.msra.mxu0 %v1157
    %1181 = vmatprep.subr.mxu0 0.0
    %1182 = vmatpush1.msra.mxu0 %v1156
    %1183 = vmatprep.subr.mxu0 0.0
    %1184 = vmatpush1.msra.mxu0 %v1155
    %1185 = vmatprep.subr.mxu0 0.0
    %1186 = vmatpush1.msra.mxu0 %v1154
    %1187 = vmatprep.subr.mxu0 0.0
    %1188 = vmatpush1.msra.mxu0 %v1153
    %1189 = vmatprep.subr.mxu0 0.0
    %1190 = vmatpush1.msra.mxu0 %v1152
    %1191 = vmatprep.subr.mxu0 0.0
    %1192 = vmatpush1.msra.mxu0 %v1151
    %1193 = vmatprep.subr.mxu0 0.0
    %1194 = vmatpush1.msra.mxu0 %v1150
    %1195 = vmatprep.subr.mxu0 0.0
    %1196 = vmatpush1.msra.mxu0 %v1149
    %1197 = vmatprep.subr.mxu0 0.0
    %1198 = vmatpush1.msra.mxu0 %v1148
    %1199 = vmatprep.subr.mxu0 0.0
    %1200 = vmatpush1.msra.mxu0 %v1147
    %1201 = vmatprep.subr.mxu0 0.0
    %1202 = vmatpush1.msra.mxu0 %v1146
    %1203 = vmatprep.subr.mxu0 0.0
    %1204 = vmatpush1.msra.mxu0 %v1145
    %1205 = vmatprep.subr.mxu0 0.0
    %1206 = vmatpush1.msra.mxu0 %v1144
    %1207 = vmatprep.subr.mxu0 0.0
    %1208 = vmatpush1.msra.mxu0 %v1143
    %1209 = vmatprep.subr.mxu0 0.0
    %1210 = vmatpush2.msra.mxu0 0.0
    %1211 = vmatprep.subr.mxu0 0.0
    %1212 = vmatpush2.msra.mxu0 0.0
    %1213 = vmatprep.subr.mxu0 0.0
    %1214 = vmatpush2.msra.mxu0 0.0
    %1215 = vmatprep.subr.mxu0 0.0
    %1216 = vmatpush2.msra.mxu0 0.0
    %1217 = vmatprep.subr.mxu0 0.0
    %1218 = vmatpush2.msra.mxu0 0.0
    %1219 = vmatprep.subr.mxu0 0.0
    %1220 = vmatpush2.msra.mxu0 0.0
    %1221 = vmatprep.subr.mxu0 0.0
    %1222 = vmatpush2.msra.mxu0 0.0
    %1223 = vmatprep.subr.mxu0 0.0
    %1224 = vmatpush2.msra.mxu0 0.0
    %1225 = vmatprep.subr.mxu0 0.0
    %1226 = vmatpush2.msra.mxu0 %v1166
    %1227 = vmatprep.subr.mxu0 0.0
    %1228 = vmatpush2.msra.mxu0 %v1165
    %1229 = vmatprep.subr.mxu0 0.0
    %1230 = vmatpush2.msra.mxu0 %v1164
    %1231 = vmatprep.subr.mxu0 0.0
    %1232 = vmatpush2.msra.mxu0 %v1163
    %1233 = vmatprep.subr.mxu0 0.0
    %1234 = vmatpush2.msra.mxu0 %v1162
    %1235 = vmatprep.subr.mxu0 0.0
    %1236 = vmatpush2.msra.mxu0 %v1161
    %1237 = vmatprep.subr.mxu0 0.0
    %1238 = vmatpush2.msra.mxu0 %v1160
    %1239 = vmatprep.subr.mxu0 0.0
    %1240 = vmatpush2.msra.mxu0 %v1159
    %1241 = vmatprep.mubr.f32.mxu0 %v1175
    %1242 = vmatmul.mubr.f32.gmra.mxu0 %v1141
    %v1243 = vpop.f32.mrf.mxu0
    %v1244 = vadd.f32 %v1172, %v1243
    %v1245 = vpop.f32.mrf.mxu0
    %1246 = vdwg.mxu0
    %v1247 = vlaneseq
    %v1248 = vand.u32 %v1247, 127
    %v1249 = vxor.u32 %v1244, 2147483648
    %v1250 = vmul.f32 %v1249, 1.442695
    %v1251 = vpow.pop %v1250
    %v1252 = vadd.f32 %v1251, 1.0
    %v1253 = vrcp.pop %v1252
    %v1254 = vmul.f32 1.0, %v1253
    %vm1255 = vcmp.eq.s32.totalorder %v1248, 9
    %1257 = vset.pattern.permute.xlu0 9
    %1258 = vperm.xlu0 %1257, %v1254
    %v1259 = vpop.permute.xlu0 %1258
    %v1261 = vsel %vm1255, %v1259, %v1244
    %1262 = vst [vmem:[#allocation2] sm:$0xff] %v1261
    %v1263 = vlaneseq
    %v1264 = vshrl.u32 %v1263, 7
    %s1265 = smul.u32 0, 8
    %v1266 = vstv %s1265
    %v1267 = vadd.s32 %v1264, %v1266
    %vm1268 = vcmp.lt.s32.totalorder %v1267, 8
    %vm1269 = vcmp.lt.s32.totalorder %v1248, 9
    %v1270 = vsub.f32 %v1261, %v33
    %v1271 = vmul.f32 %v1270, %v1270
    %vm1272 = vmand %vm1268, %vm1269
    %v1273 = vsel %vm1272, %v1271, 0.0
    %1274 = vadd.xlane.f32.xlu0 %v1273
    %v1275 = vpop.xlane.xlu0 %1274
    %v1276 = vrot.slane %v1275, 4
    %v1277 = vadd.f32 %v1275, %v1276
    %v1278 = vrot.slane %v1277, 2
    %v1279 = vadd.f32 %v1277, %v1278
    %v1280 = vrot.slane %v1279, 1
    %v1281 = vadd.f32 %v1279, %v1280
    %s1282 = vtos %v1281
    %v1283 = vlog2.pop %v1261
    %v1284 = vmul.f32 %v1283, 0.6931472
    %v1285 = vmax.f32 %v1284, -100.0
    %v1286 = vsub.f32 1.0, %v1261
    %v1287 = vlog2.pop %v1286
    %v1288 = vmul.f32 %v1287, 0.6931472
    %v1289 = vmax.f32 %v1288, -100.0
    %v1290 = vmul.f32 %v33, %v1285
    %v1291 = vsub.f32 1.0, %v33
    %v1292 = vmul.f32 %v1291, %v1289
    %v1293 = vadd.f32 %v1290, %v1292
    %v1294 = vsub.f32 0.0, %v1293
    %v1295 = vsel %vm1268, %v1294, 0.0
    %1297 = vrot.lane.b32.xlu0 %v1295, 119
    %v1298 = vpop.permute.xlu0 %1297
    %vm1300 = vcmask 7168
    %v1301 = vsel %vm1300, %v1298, 0.0
    %1302 = vadd.xlane.f32.xlu0 %v1301
    %v1303 = vpop.xlane.xlu0 %1302
    %v1304 = vrot.slane %v1303, 4
    %v1305 = vadd.f32 %v1303, %v1304
    %v1306 = vrot.slane %v1305, 2
    %v1307 = vadd.f32 %v1305, %v1306
    %v1308 = vrot.slane %v1307, 1
    %v1309 = vadd.f32 %v1307, %v1308
    %s1310 = vtos %v1309
    %vm1311 = vcmp.eq.s32.totalorder %v1248, 0
    %vm1312 = vcmp.eq.s32.totalorder %v1248, 1
    %v1313 = vstv %s1310
    %v1314 = vsel %vm1312, %v1313, 0.0
    %v1315 = vstv %s1282
    %v1316 = vsel %vm1311, %v1315, %v1314
    %1317 = vst [vmem:[#allocation4] sm:$0xff] %v1316
    // Predicated region
    $region34: #{tpu_custom_call.1} parent=1 // pred_check
      _
    $region35: #{tpu_custom_call.1} parent=1 // pred_check_branch
      %1319 = sbr.rel (0) target = $region37
    $region36: #{tpu_custom_call.1} parent=1 // pred_region
      %s1321 = ssub.s32 128, 128
      %1322 = vsyncadd [#allocation3], %s1321
      %s1324 = sshll.u32 [#allocation2], 4
      %s1325 = int_to_ptr.vmem [resolvable:$true] %s1324
      %1327 = dma.vmem_to_hbm [thread:$0]  %s1325, 128, %s8, [#allocation3]
    $region37: #{tpu_custom_call.1} parent=1 // pred_fallthru
      _
    // Predicated region
    $region38: #{tpu_custom_call.1} parent=1 // pred_check
      _
    $region39: #{tpu_custom_call.1} parent=1 // pred_check_branch
      %1329 = sbr.rel (0) target = $region41
    $region40: #{tpu_custom_call.1} parent=1 // pred_region
      %s1331 = ssub.s32 128, 128
      %1332 = vsyncadd [#allocation5], %s1331
      %s1334 = sshll.u32 [#allocation4], 4
      %s1335 = int_to_ptr.vmem [resolvable:$true] %s1334
      %1337 = dma.vmem_to_hbm [thread:$0]  %s1335, 128, %s9, [#allocation5]
    $region41: #{tpu_custom_call.1} parent=1 // pred_fallthru
      _
    // Predicated region
    $region42: #{tpu_custom_call.1} parent=1 // pred_check
      _
    $region43: #{tpu_custom_call.1} parent=1 // pred_check_branch
      %1339 = sbr.rel (0) target = $region45
    $region44: #{tpu_custom_call.1} parent=1 // pred_region
      %1340 = dma.done [#allocation3], 128
    $region45: #{tpu_custom_call.1} parent=1 // pred_fallthru
      _
    // Predicated region
    $region46: #{tpu_custom_call.1} parent=1 // pred_check
      _
    $region47: #{tpu_custom_call.1} parent=1 // pred_check_branch
      %1342 = sbr.rel (0) target = $region49
    $region48: #{tpu_custom_call.1} parent=1 // pred_region
      %1343 = dma.done [#allocation5], 128
    $region49: #{tpu_custom_call.1} parent=1 // pred_fallthru
      _
    %1344 = vsyncpa [#allocation3], 1
    %1345 = vsyncpa [#allocation5], 1

</llo_original>
